<compile_context>
chip_gen: v6e
topology: v6e:2x2x1
jax: 0.10.0
libtpu: 0.0.40
codegen_flags: <defaults>
</compile_context>

<pallas_src>
import functools

import numpy as np
import jax
import jax.numpy as jnp
from jax.experimental import pallas as pl
from jax.experimental.pallas import tpu as pltpu

LANE = 128     # TPU lane width
SUBLANE = 8    # TPU sublane width


def _round_up(x, m):
    return (x + m - 1) // m * m


def _ffnn_kernel(ids_ref,    # SMEM (B_pad*L,) int32  -- scalar prefetch, flattened
                 emb_ref,    # VMEM (V, D) f32        -- whole table, resident
                 wh_ref,     # VMEM (D, HID_pad) f32
                 bh_ref,     # VMEM (1, HID_pad) f32
                 wo_ref,     # VMEM (HID_pad, C_pad) f32
                 bo_ref,     # VMEM (1, C_pad) f32    (pad lanes hold -1e30)
                 out_ref,    # VMEM (TB, C_pad) f32
                 xbuf,       # VMEM scratch (TB, D) f32 -- per-sequence mean embeddings
                 *, L, V, TB):
    tile = pl.program_id(0)
    base = tile * (TB * L)          # offset of this batch tile in the flat id array
    D = emb_ref.shape[1]
    inv_L = jnp.float32(1.0 / L)

    # ---- embedding-bag mean for each of the TB sequences in this tile ----
    # Static unroll (TB*L small): dynamic-start VMEM row loads, static-offset
    # scratch stores.  No HBM traffic -- the table was DMA'd once.
    for i in range(TB):
        acc = jnp.zeros((1, D), jnp.float32)
        for t in range(L):
            tok = ids_ref[base + i * L + t]
            tok = jnp.minimum(jnp.maximum(tok, 0), V - 1)   # clamp: no OOB VMEM read
            acc = acc + emb_ref[pl.ds(tok, 1), :]
        xbuf[pl.ds(i, 1), :] = acc * inv_L

    x = xbuf[...]                                                        # (TB, D)

    # ---- hidden = tanh(x @ Wh + bh); padded hidden units are tanh(0) = 0 ----
    h = jnp.tanh(jnp.dot(x, wh_ref[...],
                         preferred_element_type=jnp.float32) + bh_ref[...])   # (TB, HID_pad)

    # ---- logits = h @ Wo + bo; padded classes get -1e30 -> exp underflows to 0 ----
    logits = jnp.dot(h, wo_ref[...],
                     preferred_element_type=jnp.float32) + bo_ref[...]        # (TB, C_pad)

    # ---- softmax over the class axis (exact divide: free at this size) ----
    m = jnp.max(logits, axis=-1, keepdims=True)
    e = jnp.exp(logits - m)
    out_ref[...] = e / jnp.sum(e, axis=-1, keepdims=True)


def prepare_ffnn_params(emb_table, w_hidden, b_hidden, w_output, b_output):
    """One-time weight prep (hoisted out of the per-call path):
    f32 cast + lane-dense padding of the hidden and class axes."""
    V, D = emb_table.shape
    HID = w_hidden.shape[1]
    C = w_output.shape[1]
    HID_pad = _round_up(HID, LANE)
    C_pad = _round_up(C, LANE)

    wh = jnp.zeros((D, HID_pad), jnp.float32).at[:, :HID].set(w_hidden.astype(jnp.float32))
    bh = jnp.zeros((1, HID_pad), jnp.float32).at[0, :HID].set(b_hidden.astype(jnp.float32))
    wo = jnp.zeros((HID_pad, C_pad), jnp.float32).at[:HID, :C].set(w_output.astype(jnp.float32))
    bo = jnp.full((1, C_pad), -1e30, jnp.float32).at[0, :C].set(b_output.astype(jnp.float32))
    emb = emb_table.astype(jnp.float32)
    return {"emb": emb, "wh": wh, "bh": bh, "wo": wo, "bo": bo, "num_classes": C}


def ffnn_forward(ids_batch, params):
    """ids_batch: (B, L) int32 token ids (B independent sequences).
    Returns (B, NUM_CLASSES) softmax probabilities -- one PyTorch-style FFNN
    forward per row."""
    B, L = ids_batch.shape
    emb, wh, bh, wo, bo = params["emb"], params["wh"], params["bh"], params["wo"], params["bo"]
    C = params["num_classes"]
    V, D = emb.shape
    HID_pad = wh.shape[1]
    C_pad = wo.shape[1]

    # Batch tile: sublane-aligned, fills the MXU M dimension at large B.
    # (Capped at 128 because the per-token gather loop is statically unrolled;
    #  on v6e/v7x 256 would fill the wider MXU if the gather were loop-rolled.)
    TB = min(_round_up(max(B, 1), SUBLANE), 128)
    B_pad = _round_up(B, TB)
    n_tiles = B_pad // TB

    # Flatten ids to 1-D for the SMEM scalar prefetch; pad extra rows with a
    # valid token id (their outputs are discarded below).
    ids = jnp.zeros((B_pad, L), jnp.int32).at[:B].set(ids_batch.astype(jnp.int32))
    ids_flat = ids.reshape(B_pad * L)

    kernel = functools.partial(_ffnn_kernel, L=L, V=V, TB=TB)

    grid_spec = pltpu.PrefetchScalarGridSpec(
        num_scalar_prefetch=1,              # flat ids -> SMEM
        grid=(n_tiles,),
        in_specs=[
            # Constant-index blocks: DMA'd HBM->VMEM once, resident across the grid.
            pl.BlockSpec((V, D), lambda b, ids: (0, 0)),            # embedding table
            pl.BlockSpec((D, HID_pad), lambda b, ids: (0, 0)),      # Wh (HID padded)
            pl.BlockSpec((1, HID_pad), lambda b, ids: (0, 0)),      # bh
            pl.BlockSpec((HID_pad, C_pad), lambda b, ids: (0, 0)),  # Wo (padded)
            pl.BlockSpec((1, C_pad), lambda b, ids: (0, 0)),        # bo (padded)
        ],
        out_specs=pl.BlockSpec((TB, C_pad), lambda b, ids: (b, 0)),
        scratch_shapes=[pltpu.VMEM((TB, D), jnp.float32)],          # per-tile mean embeddings
    )

    out = pl.pallas_call(
        kernel,
        grid_spec=grid_spec,
        out_shape=jax.ShapeDtypeStruct((B_pad, C_pad), jnp.float32),
        compiler_params=pltpu.CompilerParams(
            dimension_semantics=("parallel",),   # batch-tile axis shards across TCs
        ),
    )(ids_flat, emb, wh, bh, wo, bo)

    return out[:B, :C]


if __name__ == "__main__":
    # Small, module-consistent shapes: VOCAB=64, DIM_EMB=128, HID=32, CLASSES=20,
    # sequence length L=8, batch of B=4 independent sequences.
    V, D, HID, C, L, B = 64, 128, 32, 20, 8, 4
    key = jax.random.PRNGKey(0)
    k1, k2, k3, k4, k5, k6 = jax.random.split(key, 6)

    # nn.Embedding default init: N(0, 1)
    emb = jax.random.normal(k1, (V, D), dtype=jnp.float32)
    # hidden Linear: xavier_uniform weight, default uniform bias
    lim_h = float(np.sqrt(6.0 / (D + HID)))
    w_h = jax.random.uniform(k2, (D, HID), jnp.float32, -lim_h, lim_h)
    b_h = jax.random.uniform(k3, (HID,), jnp.float32,
                             -1.0 / np.sqrt(D), 1.0 / np.sqrt(D))
    # output Linear: xavier_uniform weight, default uniform bias
    lim_o = float(np.sqrt(6.0 / (HID + C)))
    w_o = jax.random.uniform(k4, (HID, C), jnp.float32, -lim_o, lim_o)
    b_o = jax.random.uniform(k5, (C,), jnp.float32,
                             -1.0 / np.sqrt(HID), 1.0 / np.sqrt(HID))

    ids = jax.random.randint(k6, (B, L), 0, V, dtype=jnp.int32)

    params = prepare_ffnn_params(emb, w_h, b_h, w_o, b_o)   # one-time weight prep
    out = jax.block_until_ready(ffnn_forward(ids, params))

    # Pure-JAX reference of the PyTorch forward (per sequence)
    mean_emb = emb[ids].sum(axis=1) / L           # (B, D)
    h = jnp.tanh(mean_emb @ w_h + b_h)            # (B, HID)
    logits = h @ w_o + b_o                        # (B, C)
    ref = jax.nn.softmax(logits, axis=-1)

    assert out.shape == (B, C)
    np.testing.assert_allclose(np.asarray(out), np.asarray(ref), rtol=1e-4, atol=1e-4)
    print("KERNEL_OK")
</pallas_src>

<mosaic_0001>
module attributes {stable_mosaic.version = 11 : i64} {
  func.func @_ffnn_kernel(%arg0: i32, %arg1: memref<64xi32, #tpu.memory_space<smem>>, %arg2: memref<64x128xf32, #tpu.memory_space<vmem>>, %arg3: memref<128x128xf32, #tpu.memory_space<vmem>>, %arg4: memref<1x128xf32, #tpu.memory_space<vmem>>, %arg5: memref<128x128xf32, #tpu.memory_space<vmem>>, %arg6: memref<1x128xf32, #tpu.memory_space<vmem>>, %arg7: memref<8x128xf32, #tpu.memory_space<vmem>>, %arg8: memref<8x128xf32, #tpu.memory_space<vmem>>) attributes {dimension_semantics = [#tpu.dimension_semantics<parallel>], iteration_bounds = array<i64: 1>, scalar_prefetch = 1 : i64, scratch_operands = 1 : i64, tpu.core_type = #tpu.core_type<tc>, window_params = [{pipeline_mode = #tpu.pipeline_mode<synchronous>, transform_indices = @transform_0, window_bounds = array<i64: 64, 128>}, {pipeline_mode = #tpu.pipeline_mode<synchronous>, transform_indices = @transform_1, window_bounds = array<i64: 128, 128>}, {pipeline_mode = #tpu.pipeline_mode<synchronous>, transform_indices = @transform_2, window_bounds = array<i64: 1, 128>}, {pipeline_mode = #tpu.pipeline_mode<synchronous>, transform_indices = @transform_3, window_bounds = array<i64: 128, 128>}, {pipeline_mode = #tpu.pipeline_mode<synchronous>, transform_indices = @transform_4, window_bounds = array<i64: 1, 128>}, {transform_indices = @transform_5, window_bounds = array<i64: 8, 128>}]} {
    %c64_i32 = arith.constant 64 : i32
    %0 = arith.muli %arg0, %c64_i32 : i32
    %cst = arith.constant 0.000000e+00 : f32
    %1 = vector.broadcast %cst : f32 to vector<1x128xf32>
    %c0_i32 = arith.constant 0 : i32
    %2 = arith.addi %0, %c0_i32 : i32
    %c0_i32_0 = arith.constant 0 : i32
    %3 = arith.addi %2, %c0_i32_0 : i32
    %4 = arith.index_cast %3 : i32 to index
    %5 = memref.load %arg1[%4] : memref<64xi32, #tpu.memory_space<smem>>
    %c0_i32_1 = arith.constant 0 : i32
    %6 = arith.maxsi %5, %c0_i32_1 : i32
    %c63_i32 = arith.constant 63 : i32
    %7 = arith.minsi %6, %c63_i32 : i32
    %8 = arith.index_cast %7 : i32 to index
    %c0 = arith.constant 0 : index
    %9 = vector.load %arg2[%8, %c0] : memref<64x128xf32, #tpu.memory_space<vmem>>, vector<1x128xf32>
    %10 = arith.addf %1, %9 : vector<1x128xf32>
    %c0_i32_2 = arith.constant 0 : i32
    %11 = arith.addi %0, %c0_i32_2 : i32
    %c1_i32 = arith.constant 1 : i32
    %12 = arith.addi %11, %c1_i32 : i32
    %13 = arith.index_cast %12 : i32 to index
    %14 = memref.load %arg1[%13] : memref<64xi32, #tpu.memory_space<smem>>
    %c0_i32_3 = arith.constant 0 : i32
    %15 = arith.maxsi %14, %c0_i32_3 : i32
    %c63_i32_4 = arith.constant 63 : i32
    %16 = arith.minsi %15, %c63_i32_4 : i32
    %17 = arith.index_cast %16 : i32 to index
    %c0_5 = arith.constant 0 : index
    %18 = vector.load %arg2[%17, %c0_5] : memref<64x128xf32, #tpu.memory_space<vmem>>, vector<1x128xf32>
    %19 = arith.addf %10, %18 : vector<1x128xf32>
    %c0_i32_6 = arith.constant 0 : i32
    %20 = arith.addi %0, %c0_i32_6 : i32
    %c2_i32 = arith.constant 2 : i32
    %21 = arith.addi %20, %c2_i32 : i32
    %22 = arith.index_cast %21 : i32 to index
    %23 = memref.load %arg1[%22] : memref<64xi32, #tpu.memory_space<smem>>
    %c0_i32_7 = arith.constant 0 : i32
    %24 = arith.maxsi %23, %c0_i32_7 : i32
    %c63_i32_8 = arith.constant 63 : i32
    %25 = arith.minsi %24, %c63_i32_8 : i32
    %26 = arith.index_cast %25 : i32 to index
    %c0_9 = arith.constant 0 : index
    %27 = vector.load %arg2[%26, %c0_9] : memref<64x128xf32, #tpu.memory_space<vmem>>, vector<1x128xf32>
    %28 = arith.addf %19, %27 : vector<1x128xf32>
    %c0_i32_10 = arith.constant 0 : i32
    %29 = arith.addi %0, %c0_i32_10 : i32
    %c3_i32 = arith.constant 3 : i32
    %30 = arith.addi %29, %c3_i32 : i32
    %31 = arith.index_cast %30 : i32 to index
    %32 = memref.load %arg1[%31] : memref<64xi32, #tpu.memory_space<smem>>
    %c0_i32_11 = arith.constant 0 : i32
    %33 = arith.maxsi %32, %c0_i32_11 : i32
    %c63_i32_12 = arith.constant 63 : i32
    %34 = arith.minsi %33, %c63_i32_12 : i32
    %35 = arith.index_cast %34 : i32 to index
    %c0_13 = arith.constant 0 : index
    %36 = vector.load %arg2[%35, %c0_13] : memref<64x128xf32, #tpu.memory_space<vmem>>, vector<1x128xf32>
    %37 = arith.addf %28, %36 : vector<1x128xf32>
    %c0_i32_14 = arith.constant 0 : i32
    %38 = arith.addi %0, %c0_i32_14 : i32
    %c4_i32 = arith.constant 4 : i32
    %39 = arith.addi %38, %c4_i32 : i32
    %40 = arith.index_cast %39 : i32 to index
    %41 = memref.load %arg1[%40] : memref<64xi32, #tpu.memory_space<smem>>
    %c0_i32_15 = arith.constant 0 : i32
    %42 = arith.maxsi %41, %c0_i32_15 : i32
    %c63_i32_16 = arith.constant 63 : i32
    %43 = arith.minsi %42, %c63_i32_16 : i32
    %44 = arith.index_cast %43 : i32 to index
    %c0_17 = arith.constant 0 : index
    %45 = vector.load %arg2[%44, %c0_17] : memref<64x128xf32, #tpu.memory_space<vmem>>, vector<1x128xf32>
    %46 = arith.addf %37, %45 : vector<1x128xf32>
    %c0_i32_18 = arith.constant 0 : i32
    %47 = arith.addi %0, %c0_i32_18 : i32
    %c5_i32 = arith.constant 5 : i32
    %48 = arith.addi %47, %c5_i32 : i32
    %49 = arith.index_cast %48 : i32 to index
    %50 = memref.load %arg1[%49] : memref<64xi32, #tpu.memory_space<smem>>
    %c0_i32_19 = arith.constant 0 : i32
    %51 = arith.maxsi %50, %c0_i32_19 : i32
    %c63_i32_20 = arith.constant 63 : i32
    %52 = arith.minsi %51, %c63_i32_20 : i32
    %53 = arith.index_cast %52 : i32 to index
    %c0_21 = arith.constant 0 : index
    %54 = vector.load %arg2[%53, %c0_21] : memref<64x128xf32, #tpu.memory_space<vmem>>, vector<1x128xf32>
    %55 = arith.addf %46, %54 : vector<1x128xf32>
    %c0_i32_22 = arith.constant 0 : i32
    %56 = arith.addi %0, %c0_i32_22 : i32
    %c6_i32 = arith.constant 6 : i32
    %57 = arith.addi %56, %c6_i32 : i32
    %58 = arith.index_cast %57 : i32 to index
    %59 = memref.load %arg1[%58] : memref<64xi32, #tpu.memory_space<smem>>
    %c0_i32_23 = arith.constant 0 : i32
    %60 = arith.maxsi %59, %c0_i32_23 : i32
    %c63_i32_24 = arith.constant 63 : i32
    %61 = arith.minsi %60, %c63_i32_24 : i32
    %62 = arith.index_cast %61 : i32 to index
    %c0_25 = arith.constant 0 : index
    %63 = vector.load %arg2[%62, %c0_25] : memref<64x128xf32, #tpu.memory_space<vmem>>, vector<1x128xf32>
    %64 = arith.addf %55, %63 : vector<1x128xf32>
    %c0_i32_26 = arith.constant 0 : i32
    %65 = arith.addi %0, %c0_i32_26 : i32
    %c7_i32 = arith.constant 7 : i32
    %66 = arith.addi %65, %c7_i32 : i32
    %67 = arith.index_cast %66 : i32 to index
    %68 = memref.load %arg1[%67] : memref<64xi32, #tpu.memory_space<smem>>
    %c0_i32_27 = arith.constant 0 : i32
    %69 = arith.maxsi %68, %c0_i32_27 : i32
    %c63_i32_28 = arith.constant 63 : i32
    %70 = arith.minsi %69, %c63_i32_28 : i32
    %71 = arith.index_cast %70 : i32 to index
    %c0_29 = arith.constant 0 : index
    %72 = vector.load %arg2[%71, %c0_29] : memref<64x128xf32, #tpu.memory_space<vmem>>, vector<1x128xf32>
    %73 = arith.addf %64, %72 : vector<1x128xf32>
    %cst_30 = arith.constant 1.250000e-01 : f32
    %74 = vector.broadcast %cst_30 : f32 to vector<1x128xf32>
    %75 = arith.mulf %73, %74 : vector<1x128xf32>
    %c0_31 = arith.constant 0 : index
    %c0_32 = arith.constant 0 : index
    %76 = vector.load %arg8[%c0_31, %c0_32] : memref<8x128xf32, #tpu.memory_space<vmem>>, vector<1x128xf32>
    tpu.vector_store %arg8[%c0_31, %c0_32], %75 {strides = array<i32>} : memref<8x128xf32, #tpu.memory_space<vmem>>, vector<1x128xf32>,
    %cst_33 = arith.constant 0.000000e+00 : f32
    %77 = vector.broadcast %cst_33 : f32 to vector<1x128xf32>
    %c8_i32 = arith.constant 8 : i32
    %78 = arith.addi %0, %c8_i32 : i32
    %c0_i32_34 = arith.constant 0 : i32
    %79 = arith.addi %78, %c0_i32_34 : i32
    %80 = arith.index_cast %79 : i32 to index
    %81 = memref.load %arg1[%80] : memref<64xi32, #tpu.memory_space<smem>>
    %c0_i32_35 = arith.constant 0 : i32
    %82 = arith.maxsi %81, %c0_i32_35 : i32
    %c63_i32_36 = arith.constant 63 : i32
    %83 = arith.minsi %82, %c63_i32_36 : i32
    %84 = arith.index_cast %83 : i32 to index
    %c0_37 = arith.constant 0 : index
    %85 = vector.load %arg2[%84, %c0_37] : memref<64x128xf32, #tpu.memory_space<vmem>>, vector<1x128xf32>
    %86 = arith.addf %77, %85 : vector<1x128xf32>
    %c8_i32_38 = arith.constant 8 : i32
    %87 = arith.addi %0, %c8_i32_38 : i32
    %c1_i32_39 = arith.constant 1 : i32
    %88 = arith.addi %87, %c1_i32_39 : i32
    %89 = arith.index_cast %88 : i32 to index
    %90 = memref.load %arg1[%89] : memref<64xi32, #tpu.memory_space<smem>>
    %c0_i32_40 = arith.constant 0 : i32
    %91 = arith.maxsi %90, %c0_i32_40 : i32
    %c63_i32_41 = arith.constant 63 : i32
    %92 = arith.minsi %91, %c63_i32_41 : i32
    %93 = arith.index_cast %92 : i32 to index
    %c0_42 = arith.constant 0 : index
    %94 = vector.load %arg2[%93, %c0_42] : memref<64x128xf32, #tpu.memory_space<vmem>>, vector<1x128xf32>
    %95 = arith.addf %86, %94 : vector<1x128xf32>
    %c8_i32_43 = arith.constant 8 : i32
    %96 = arith.addi %0, %c8_i32_43 : i32
    %c2_i32_44 = arith.constant 2 : i32
    %97 = arith.addi %96, %c2_i32_44 : i32
    %98 = arith.index_cast %97 : i32 to index
    %99 = memref.load %arg1[%98] : memref<64xi32, #tpu.memory_space<smem>>
    %c0_i32_45 = arith.constant 0 : i32
    %100 = arith.maxsi %99, %c0_i32_45 : i32
    %c63_i32_46 = arith.constant 63 : i32
    %101 = arith.minsi %100, %c63_i32_46 : i32
    %102 = arith.index_cast %101 : i32 to index
    %c0_47 = arith.constant 0 : index
    %103 = vector.load %arg2[%102, %c0_47] : memref<64x128xf32, #tpu.memory_space<vmem>>, vector<1x128xf32>
    %104 = arith.addf %95, %103 : vector<1x128xf32>
    %c8_i32_48 = arith.constant 8 : i32
    %105 = arith.addi %0, %c8_i32_48 : i32
    %c3_i32_49 = arith.constant 3 : i32
    %106 = arith.addi %105, %c3_i32_49 : i32
    %107 = arith.index_cast %106 : i32 to index
    %108 = memref.load %arg1[%107] : memref<64xi32, #tpu.memory_space<smem>>
    %c0_i32_50 = arith.constant 0 : i32
    %109 = arith.maxsi %108, %c0_i32_50 : i32
    %c63_i32_51 = arith.constant 63 : i32
    %110 = arith.minsi %109, %c63_i32_51 : i32
    %111 = arith.index_cast %110 : i32 to index
    %c0_52 = arith.constant 0 : index
    %112 = vector.load %arg2[%111, %c0_52] : memref<64x128xf32, #tpu.memory_space<vmem>>, vector<1x128xf32>
    %113 = arith.addf %104, %112 : vector<1x128xf32>
    %c8_i32_53 = arith.constant 8 : i32
    %114 = arith.addi %0, %c8_i32_53 : i32
    %c4_i32_54 = arith.constant 4 : i32
    %115 = arith.addi %114, %c4_i32_54 : i32
    %116 = arith.index_cast %115 : i32 to index
    %117 = memref.load %arg1[%116] : memref<64xi32, #tpu.memory_space<smem>>
    %c0_i32_55 = arith.constant 0 : i32
    %118 = arith.maxsi %117, %c0_i32_55 : i32
    %c63_i32_56 = arith.constant 63 : i32
    %119 = arith.minsi %118, %c63_i32_56 : i32
    %120 = arith.index_cast %119 : i32 to index
    %c0_57 = arith.constant 0 : index
    %121 = vector.load %arg2[%120, %c0_57] : memref<64x128xf32, #tpu.memory_space<vmem>>, vector<1x128xf32>
    %122 = arith.addf %113, %121 : vector<1x128xf32>
    %c8_i32_58 = arith.constant 8 : i32
    %123 = arith.addi %0, %c8_i32_58 : i32
    %c5_i32_59 = arith.constant 5 : i32
    %124 = arith.addi %123, %c5_i32_59 : i32
    %125 = arith.index_cast %124 : i32 to index
    %126 = memref.load %arg1[%125] : memref<64xi32, #tpu.memory_space<smem>>
    %c0_i32_60 = arith.constant 0 : i32
    %127 = arith.maxsi %126, %c0_i32_60 : i32
    %c63_i32_61 = arith.constant 63 : i32
    %128 = arith.minsi %127, %c63_i32_61 : i32
    %129 = arith.index_cast %128 : i32 to index
    %c0_62 = arith.constant 0 : index
    %130 = vector.load %arg2[%129, %c0_62] : memref<64x128xf32, #tpu.memory_space<vmem>>, vector<1x128xf32>
    %131 = arith.addf %122, %130 : vector<1x128xf32>
    %c8_i32_63 = arith.constant 8 : i32
    %132 = arith.addi %0, %c8_i32_63 : i32
    %c6_i32_64 = arith.constant 6 : i32
    %133 = arith.addi %132, %c6_i32_64 : i32
    %134 = arith.index_cast %133 : i32 to index
    %135 = memref.load %arg1[%134] : memref<64xi32, #tpu.memory_space<smem>>
    %c0_i32_65 = arith.constant 0 : i32
    %136 = arith.maxsi %135, %c0_i32_65 : i32
    %c63_i32_66 = arith.constant 63 : i32
    %137 = arith.minsi %136, %c63_i32_66 : i32
    %138 = arith.index_cast %137 : i32 to index
    %c0_67 = arith.constant 0 : index
    %139 = vector.load %arg2[%138, %c0_67] : memref<64x128xf32, #tpu.memory_space<vmem>>, vector<1x128xf32>
    %140 = arith.addf %131, %139 : vector<1x128xf32>
    %c8_i32_68 = arith.constant 8 : i32
    %141 = arith.addi %0, %c8_i32_68 : i32
    %c7_i32_69 = arith.constant 7 : i32
    %142 = arith.addi %141, %c7_i32_69 : i32
    %143 = arith.index_cast %142 : i32 to index
    %144 = memref.load %arg1[%143] : memref<64xi32, #tpu.memory_space<smem>>
    %c0_i32_70 = arith.constant 0 : i32
    %145 = arith.maxsi %144, %c0_i32_70 : i32
    %c63_i32_71 = arith.constant 63 : i32
    %146 = arith.minsi %145, %c63_i32_71 : i32
    %147 = arith.index_cast %146 : i32 to index
    %c0_72 = arith.constant 0 : index
    %148 = vector.load %arg2[%147, %c0_72] : memref<64x128xf32, #tpu.memory_space<vmem>>, vector<1x128xf32>
    %149 = arith.addf %140, %148 : vector<1x128xf32>
    %cst_73 = arith.constant 1.250000e-01 : f32
    %150 = vector.broadcast %cst_73 : f32 to vector<1x128xf32>
    %151 = arith.mulf %149, %150 : vector<1x128xf32>
    %c1 = arith.constant 1 : index
    %c0_74 = arith.constant 0 : index
    %152 = vector.load %arg8[%c1, %c0_74] : memref<8x128xf32, #tpu.memory_space<vmem>>, vector<1x128xf32>
    tpu.vector_store %arg8[%c1, %c0_74], %151 {strides = array<i32>} : memref<8x128xf32, #tpu.memory_space<vmem>>, vector<1x128xf32>,
    %cst_75 = arith.constant 0.000000e+00 : f32
    %153 = vector.broadcast %cst_75 : f32 to vector<1x128xf32>
    %c16_i32 = arith.constant 16 : i32
    %154 = arith.addi %0, %c16_i32 : i32
    %c0_i32_76 = arith.constant 0 : i32
    %155 = arith.addi %154, %c0_i32_76 : i32
    %156 = arith.index_cast %155 : i32 to index
    %157 = memref.load %arg1[%156] : memref<64xi32, #tpu.memory_space<smem>>
    %c0_i32_77 = arith.constant 0 : i32
    %158 = arith.maxsi %157, %c0_i32_77 : i32
    %c63_i32_78 = arith.constant 63 : i32
    %159 = arith.minsi %158, %c63_i32_78 : i32
    %160 = arith.index_cast %159 : i32 to index
    %c0_79 = arith.constant 0 : index
    %161 = vector.load %arg2[%160, %c0_79] : memref<64x128xf32, #tpu.memory_space<vmem>>, vector<1x128xf32>
    %162 = arith.addf %153, %161 : vector<1x128xf32>
    %c16_i32_80 = arith.constant 16 : i32
    %163 = arith.addi %0, %c16_i32_80 : i32
    %c1_i32_81 = arith.constant 1 : i32
    %164 = arith.addi %163, %c1_i32_81 : i32
    %165 = arith.index_cast %164 : i32 to index
    %166 = memref.load %arg1[%165] : memref<64xi32, #tpu.memory_space<smem>>
    %c0_i32_82 = arith.constant 0 : i32
    %167 = arith.maxsi %166, %c0_i32_82 : i32
    %c63_i32_83 = arith.constant 63 : i32
    %168 = arith.minsi %167, %c63_i32_83 : i32
    %169 = arith.index_cast %168 : i32 to index
    %c0_84 = arith.constant 0 : index
    %170 = vector.load %arg2[%169, %c0_84] : memref<64x128xf32, #tpu.memory_space<vmem>>, vector<1x128xf32>
    %171 = arith.addf %162, %170 : vector<1x128xf32>
    %c16_i32_85 = arith.constant 16 : i32
    %172 = arith.addi %0, %c16_i32_85 : i32
    %c2_i32_86 = arith.constant 2 : i32
    %173 = arith.addi %172, %c2_i32_86 : i32
    %174 = arith.index_cast %173 : i32 to index
    %175 = memref.load %arg1[%174] : memref<64xi32, #tpu.memory_space<smem>>
    %c0_i32_87 = arith.constant 0 : i32
    %176 = arith.maxsi %175, %c0_i32_87 : i32
    %c63_i32_88 = arith.constant 63 : i32
    %177 = arith.minsi %176, %c63_i32_88 : i32
    %178 = arith.index_cast %177 : i32 to index
    %c0_89 = arith.constant 0 : index
    %179 = vector.load %arg2[%178, %c0_89] : memref<64x128xf32, #tpu.memory_space<vmem>>, vector<1x128xf32>
    %180 = arith.addf %171, %179 : vector<1x128xf32>
    %c16_i32_90 = arith.constant 16 : i32
    %181 = arith.addi %0, %c16_i32_90 : i32
    %c3_i32_91 = arith.constant 3 : i32
    %182 = arith.addi %181, %c3_i32_91 : i32
    %183 = arith.index_cast %182 : i32 to index
    %184 = memref.load %arg1[%183] : memref<64xi32, #tpu.memory_space<smem>>
    %c0_i32_92 = arith.constant 0 : i32
    %185 = arith.maxsi %184, %c0_i32_92 : i32
    %c63_i32_93 = arith.constant 63 : i32
    %186 = arith.minsi %185, %c63_i32_93 : i32
    %187 = arith.index_cast %186 : i32 to index
    %c0_94 = arith.constant 0 : index
    %188 = vector.load %arg2[%187, %c0_94] : memref<64x128xf32, #tpu.memory_space<vmem>>, vector<1x128xf32>
    %189 = arith.addf %180, %188 : vector<1x128xf32>
    %c16_i32_95 = arith.constant 16 : i32
    %190 = arith.addi %0, %c16_i32_95 : i32
    %c4_i32_96 = arith.constant 4 : i32
    %191 = arith.addi %190, %c4_i32_96 : i32
    %192 = arith.index_cast %191 : i32 to index
    %193 = memref.load %arg1[%192] : memref<64xi32, #tpu.memory_space<smem>>
    %c0_i32_97 = arith.constant 0 : i32
    %194 = arith.maxsi %193, %c0_i32_97 : i32
    %c63_i32_98 = arith.constant 63 : i32
    %195 = arith.minsi %194, %c63_i32_98 : i32
    %196 = arith.index_cast %195 : i32 to index
    %c0_99 = arith.constant 0 : index
    %197 = vector.load %arg2[%196, %c0_99] : memref<64x128xf32, #tpu.memory_space<vmem>>, vector<1x128xf32>
    %198 = arith.addf %189, %197 : vector<1x128xf32>
    %c16_i32_100 = arith.constant 16 : i32
    %199 = arith.addi %0, %c16_i32_100 : i32
    %c5_i32_101 = arith.constant 5 : i32
    %200 = arith.addi %199, %c5_i32_101 : i32
    %201 = arith.index_cast %200 : i32 to index
    %202 = memref.load %arg1[%201] : memref<64xi32, #tpu.memory_space<smem>>
    %c0_i32_102 = arith.constant 0 : i32
    %203 = arith.maxsi %202, %c0_i32_102 : i32
    %c63_i32_103 = arith.constant 63 : i32
    %204 = arith.minsi %203, %c63_i32_103 : i32
    %205 = arith.index_cast %204 : i32 to index
    %c0_104 = arith.constant 0 : index
    %206 = vector.load %arg2[%205, %c0_104] : memref<64x128xf32, #tpu.memory_space<vmem>>, vector<1x128xf32>
    %207 = arith.addf %198, %206 : vector<1x128xf32>
    %c16_i32_105 = arith.constant 16 : i32
    %208 = arith.addi %0, %c16_i32_105 : i32
    %c6_i32_106 = arith.constant 6 : i32
    %209 = arith.addi %208, %c6_i32_106 : i32
    %210 = arith.index_cast %209 : i32 to index
    %211 = memref.load %arg1[%210] : memref<64xi32, #tpu.memory_space<smem>>
    %c0_i32_107 = arith.constant 0 : i32
    %212 = arith.maxsi %211, %c0_i32_107 : i32
    %c63_i32_108 = arith.constant 63 : i32
    %213 = arith.minsi %212, %c63_i32_108 : i32
    %214 = arith.index_cast %213 : i32 to index
    %c0_109 = arith.constant 0 : index
    %215 = vector.load %arg2[%214, %c0_109] : memref<64x128xf32, #tpu.memory_space<vmem>>, vector<1x128xf32>
    %216 = arith.addf %207, %215 : vector<1x128xf32>
    %c16_i32_110 = arith.constant 16 : i32
    %217 = arith.addi %0, %c16_i32_110 : i32
    %c7_i32_111 = arith.constant 7 : i32
    %218 = arith.addi %217, %c7_i32_111 : i32
    %219 = arith.index_cast %218 : i32 to index
    %220 = memref.load %arg1[%219] : memref<64xi32, #tpu.memory_space<smem>>
    %c0_i32_112 = arith.constant 0 : i32
    %221 = arith.maxsi %220, %c0_i32_112 : i32
    %c63_i32_113 = arith.constant 63 : i32
    %222 = arith.minsi %221, %c63_i32_113 : i32
    %223 = arith.index_cast %222 : i32 to index
    %c0_114 = arith.constant 0 : index
    %224 = vector.load %arg2[%223, %c0_114] : memref<64x128xf32, #tpu.memory_space<vmem>>, vector<1x128xf32>
    %225 = arith.addf %216, %224 : vector<1x128xf32>
    %cst_115 = arith.constant 1.250000e-01 : f32
    %226 = vector.broadcast %cst_115 : f32 to vector<1x128xf32>
    %227 = arith.mulf %225, %226 : vector<1x128xf32>
    %c2 = arith.constant 2 : index
    %c0_116 = arith.constant 0 : index
    %228 = vector.load %arg8[%c2, %c0_116] : memref<8x128xf32, #tpu.memory_space<vmem>>, vector<1x128xf32>
    tpu.vector_store %arg8[%c2, %c0_116], %227 {strides = array<i32>} : memref<8x128xf32, #tpu.memory_space<vmem>>, vector<1x128xf32>,
    %cst_117 = arith.constant 0.000000e+00 : f32
    %229 = vector.broadcast %cst_117 : f32 to vector<1x128xf32>
    %c24_i32 = arith.constant 24 : i32
    %230 = arith.addi %0, %c24_i32 : i32
    %c0_i32_118 = arith.constant 0 : i32
    %231 = arith.addi %230, %c0_i32_118 : i32
    %232 = arith.index_cast %231 : i32 to index
    %233 = memref.load %arg1[%232] : memref<64xi32, #tpu.memory_space<smem>>
    %c0_i32_119 = arith.constant 0 : i32
    %234 = arith.maxsi %233, %c0_i32_119 : i32
    %c63_i32_120 = arith.constant 63 : i32
    %235 = arith.minsi %234, %c63_i32_120 : i32
    %236 = arith.index_cast %235 : i32 to index
    %c0_121 = arith.constant 0 : index
    %237 = vector.load %arg2[%236, %c0_121] : memref<64x128xf32, #tpu.memory_space<vmem>>, vector<1x128xf32>
    %238 = arith.addf %229, %237 : vector<1x128xf32>
    %c24_i32_122 = arith.constant 24 : i32
    %239 = arith.addi %0, %c24_i32_122 : i32
    %c1_i32_123 = arith.constant 1 : i32
    %240 = arith.addi %239, %c1_i32_123 : i32
    %241 = arith.index_cast %240 : i32 to index
    %242 = memref.load %arg1[%241] : memref<64xi32, #tpu.memory_space<smem>>
    %c0_i32_124 = arith.constant 0 : i32
    %243 = arith.maxsi %242, %c0_i32_124 : i32
    %c63_i32_125 = arith.constant 63 : i32
    %244 = arith.minsi %243, %c63_i32_125 : i32
    %245 = arith.index_cast %244 : i32 to index
    %c0_126 = arith.constant 0 : index
    %246 = vector.load %arg2[%245, %c0_126] : memref<64x128xf32, #tpu.memory_space<vmem>>, vector<1x128xf32>
    %247 = arith.addf %238, %246 : vector<1x128xf32>
    %c24_i32_127 = arith.constant 24 : i32
    %248 = arith.addi %0, %c24_i32_127 : i32
    %c2_i32_128 = arith.constant 2 : i32
    %249 = arith.addi %248, %c2_i32_128 : i32
    %250 = arith.index_cast %249 : i32 to index
    %251 = memref.load %arg1[%250] : memref<64xi32, #tpu.memory_space<smem>>
    %c0_i32_129 = arith.constant 0 : i32
    %252 = arith.maxsi %251, %c0_i32_129 : i32
    %c63_i32_130 = arith.constant 63 : i32
    %253 = arith.minsi %252, %c63_i32_130 : i32
    %254 = arith.index_cast %253 : i32 to index
    %c0_131 = arith.constant 0 : index
    %255 = vector.load %arg2[%254, %c0_131] : memref<64x128xf32, #tpu.memory_space<vmem>>, vector<1x128xf32>
    %256 = arith.addf %247, %255 : vector<1x128xf32>
    %c24_i32_132 = arith.constant 24 : i32
    %257 = arith.addi %0, %c24_i32_132 : i32
    %c3_i32_133 = arith.constant 3 : i32
    %258 = arith.addi %257, %c3_i32_133 : i32
    %259 = arith.index_cast %258 : i32 to index
    %260 = memref.load %arg1[%259] : memref<64xi32, #tpu.memory_space<smem>>
    %c0_i32_134 = arith.constant 0 : i32
    %261 = arith.maxsi %260, %c0_i32_134 : i32
    %c63_i32_135 = arith.constant 63 : i32
    %262 = arith.minsi %261, %c63_i32_135 : i32
    %263 = arith.index_cast %262 : i32 to index
    %c0_136 = arith.constant 0 : index
    %264 = vector.load %arg2[%263, %c0_136] : memref<64x128xf32, #tpu.memory_space<vmem>>, vector<1x128xf32>
    %265 = arith.addf %256, %264 : vector<1x128xf32>
    %c24_i32_137 = arith.constant 24 : i32
    %266 = arith.addi %0, %c24_i32_137 : i32
    %c4_i32_138 = arith.constant 4 : i32
    %267 = arith.addi %266, %c4_i32_138 : i32
    %268 = arith.index_cast %267 : i32 to index
    %269 = memref.load %arg1[%268] : memref<64xi32, #tpu.memory_space<smem>>
    %c0_i32_139 = arith.constant 0 : i32
    %270 = arith.maxsi %269, %c0_i32_139 : i32
    %c63_i32_140 = arith.constant 63 : i32
    %271 = arith.minsi %270, %c63_i32_140 : i32
    %272 = arith.index_cast %271 : i32 to index
    %c0_141 = arith.constant 0 : index
    %273 = vector.load %arg2[%272, %c0_141] : memref<64x128xf32, #tpu.memory_space<vmem>>, vector<1x128xf32>
    %274 = arith.addf %265, %273 : vector<1x128xf32>
    %c24_i32_142 = arith.constant 24 : i32
    %275 = arith.addi %0, %c24_i32_142 : i32
    %c5_i32_143 = arith.constant 5 : i32
    %276 = arith.addi %275, %c5_i32_143 : i32
    %277 = arith.index_cast %276 : i32 to index
    %278 = memref.load %arg1[%277] : memref<64xi32, #tpu.memory_space<smem>>
    %c0_i32_144 = arith.constant 0 : i32
    %279 = arith.maxsi %278, %c0_i32_144 : i32
    %c63_i32_145 = arith.constant 63 : i32
    %280 = arith.minsi %279, %c63_i32_145 : i32
    %281 = arith.index_cast %280 : i32 to index
    %c0_146 = arith.constant 0 : index
    %282 = vector.load %arg2[%281, %c0_146] : memref<64x128xf32, #tpu.memory_space<vmem>>, vector<1x128xf32>
    %283 = arith.addf %274, %282 : vector<1x128xf32>
    %c24_i32_147 = arith.constant 24 : i32
    %284 = arith.addi %0, %c24_i32_147 : i32
    %c6_i32_148 = arith.constant 6 : i32
    %285 = arith.addi %284, %c6_i32_148 : i32
    %286 = arith.index_cast %285 : i32 to index
    %287 = memref.load %arg1[%286] : memref<64xi32, #tpu.memory_space<smem>>
    %c0_i32_149 = arith.constant 0 : i32
    %288 = arith.maxsi %287, %c0_i32_149 : i32
    %c63_i32_150 = arith.constant 63 : i32
    %289 = arith.minsi %288, %c63_i32_150 : i32
    %290 = arith.index_cast %289 : i32 to index
    %c0_151 = arith.constant 0 : index
    %291 = vector.load %arg2[%290, %c0_151] : memref<64x128xf32, #tpu.memory_space<vmem>>, vector<1x128xf32>
    %292 = arith.addf %283, %291 : vector<1x128xf32>
    %c24_i32_152 = arith.constant 24 : i32
    %293 = arith.addi %0, %c24_i32_152 : i32
    %c7_i32_153 = arith.constant 7 : i32
    %294 = arith.addi %293, %c7_i32_153 : i32
    %295 = arith.index_cast %294 : i32 to index
    %296 = memref.load %arg1[%295] : memref<64xi32, #tpu.memory_space<smem>>
    %c0_i32_154 = arith.constant 0 : i32
    %297 = arith.maxsi %296, %c0_i32_154 : i32
    %c63_i32_155 = arith.constant 63 : i32
    %298 = arith.minsi %297, %c63_i32_155 : i32
    %299 = arith.index_cast %298 : i32 to index
    %c0_156 = arith.constant 0 : index
    %300 = vector.load %arg2[%299, %c0_156] : memref<64x128xf32, #tpu.memory_space<vmem>>, vector<1x128xf32>
    %301 = arith.addf %292, %300 : vector<1x128xf32>
    %cst_157 = arith.constant 1.250000e-01 : f32
    %302 = vector.broadcast %cst_157 : f32 to vector<1x128xf32>
    %303 = arith.mulf %301, %302 : vector<1x128xf32>
    %c3 = arith.constant 3 : index
    %c0_158 = arith.constant 0 : index
    %304 = vector.load %arg8[%c3, %c0_158] : memref<8x128xf32, #tpu.memory_space<vmem>>, vector<1x128xf32>
    tpu.vector_store %arg8[%c3, %c0_158], %303 {strides = array<i32>} : memref<8x128xf32, #tpu.memory_space<vmem>>, vector<1x128xf32>,
    %cst_159 = arith.constant 0.000000e+00 : f32
    %305 = vector.broadcast %cst_159 : f32 to vector<1x128xf32>
    %c32_i32 = arith.constant 32 : i32
    %306 = arith.addi %0, %c32_i32 : i32
    %c0_i32_160 = arith.constant 0 : i32
    %307 = arith.addi %306, %c0_i32_160 : i32
    %308 = arith.index_cast %307 : i32 to index
    %309 = memref.load %arg1[%308] : memref<64xi32, #tpu.memory_space<smem>>
    %c0_i32_161 = arith.constant 0 : i32
    %310 = arith.maxsi %309, %c0_i32_161 : i32
    %c63_i32_162 = arith.constant 63 : i32
    %311 = arith.minsi %310, %c63_i32_162 : i32
    %312 = arith.index_cast %311 : i32 to index
    %c0_163 = arith.constant 0 : index
    %313 = vector.load %arg2[%312, %c0_163] : memref<64x128xf32, #tpu.memory_space<vmem>>, vector<1x128xf32>
    %314 = arith.addf %305, %313 : vector<1x128xf32>
    %c32_i32_164 = arith.constant 32 : i32
    %315 = arith.addi %0, %c32_i32_164 : i32
    %c1_i32_165 = arith.constant 1 : i32
    %316 = arith.addi %315, %c1_i32_165 : i32
    %317 = arith.index_cast %316 : i32 to index
    %318 = memref.load %arg1[%317] : memref<64xi32, #tpu.memory_space<smem>>
    %c0_i32_166 = arith.constant 0 : i32
    %319 = arith.maxsi %318, %c0_i32_166 : i32
    %c63_i32_167 = arith.constant 63 : i32
    %320 = arith.minsi %319, %c63_i32_167 : i32
    %321 = arith.index_cast %320 : i32 to index
    %c0_168 = arith.constant 0 : index
    %322 = vector.load %arg2[%321, %c0_168] : memref<64x128xf32, #tpu.memory_space<vmem>>, vector<1x128xf32>
    %323 = arith.addf %314, %322 : vector<1x128xf32>
    %c32_i32_169 = arith.constant 32 : i32
    %324 = arith.addi %0, %c32_i32_169 : i32
    %c2_i32_170 = arith.constant 2 : i32
    %325 = arith.addi %324, %c2_i32_170 : i32
    %326 = arith.index_cast %325 : i32 to index
    %327 = memref.load %arg1[%326] : memref<64xi32, #tpu.memory_space<smem>>
    %c0_i32_171 = arith.constant 0 : i32
    %328 = arith.maxsi %327, %c0_i32_171 : i32
    %c63_i32_172 = arith.constant 63 : i32
    %329 = arith.minsi %328, %c63_i32_172 : i32
    %330 = arith.index_cast %329 : i32 to index
    %c0_173 = arith.constant 0 : index
    %331 = vector.load %arg2[%330, %c0_173] : memref<64x128xf32, #tpu.memory_space<vmem>>, vector<1x128xf32>
    %332 = arith.addf %323, %331 : vector<1x128xf32>
    %c32_i32_174 = arith.constant 32 : i32
    %333 = arith.addi %0, %c32_i32_174 : i32
    %c3_i32_175 = arith.constant 3 : i32
    %334 = arith.addi %333, %c3_i32_175 : i32
    %335 = arith.index_cast %334 : i32 to index
    %336 = memref.load %arg1[%335] : memref<64xi32, #tpu.memory_space<smem>>
    %c0_i32_176 = arith.constant 0 : i32
    %337 = arith.maxsi %336, %c0_i32_176 : i32
    %c63_i32_177 = arith.constant 63 : i32
    %338 = arith.minsi %337, %c63_i32_177 : i32
    %339 = arith.index_cast %338 : i32 to index
    %c0_178 = arith.constant 0 : index
    %340 = vector.load %arg2[%339, %c0_178] : memref<64x128xf32, #tpu.memory_space<vmem>>, vector<1x128xf32>
    %341 = arith.addf %332, %340 : vector<1x128xf32>
    %c32_i32_179 = arith.constant 32 : i32
    %342 = arith.addi %0, %c32_i32_179 : i32
    %c4_i32_180 = arith.constant 4 : i32
    %343 = arith.addi %342, %c4_i32_180 : i32
    %344 = arith.index_cast %343 : i32 to index
    %345 = memref.load %arg1[%344] : memref<64xi32, #tpu.memory_space<smem>>
    %c0_i32_181 = arith.constant 0 : i32
    %346 = arith.maxsi %345, %c0_i32_181 : i32
    %c63_i32_182 = arith.constant 63 : i32
    %347 = arith.minsi %346, %c63_i32_182 : i32
    %348 = arith.index_cast %347 : i32 to index
    %c0_183 = arith.constant 0 : index
    %349 = vector.load %arg2[%348, %c0_183] : memref<64x128xf32, #tpu.memory_space<vmem>>, vector<1x128xf32>
    %350 = arith.addf %341, %349 : vector<1x128xf32>
    %c32_i32_184 = arith.constant 32 : i32
    %351 = arith.addi %0, %c32_i32_184 : i32
    %c5_i32_185 = arith.constant 5 : i32
    %352 = arith.addi %351, %c5_i32_185 : i32
    %353 = arith.index_cast %352 : i32 to index
    %354 = memref.load %arg1[%353] : memref<64xi32, #tpu.memory_space<smem>>
    %c0_i32_186 = arith.constant 0 : i32
    %355 = arith.maxsi %354, %c0_i32_186 : i32
    %c63_i32_187 = arith.constant 63 : i32
    %356 = arith.minsi %355, %c63_i32_187 : i32
    %357 = arith.index_cast %356 : i32 to index
    %c0_188 = arith.constant 0 : index
    %358 = vector.load %arg2[%357, %c0_188] : memref<64x128xf32, #tpu.memory_space<vmem>>, vector<1x128xf32>
    %359 = arith.addf %350, %358 : vector<1x128xf32>
    %c32_i32_189 = arith.constant 32 : i32
    %360 = arith.addi %0, %c32_i32_189 : i32
    %c6_i32_190 = arith.constant 6 : i32
    %361 = arith.addi %360, %c6_i32_190 : i32
    %362 = arith.index_cast %361 : i32 to index
    %363 = memref.load %arg1[%362] : memref<64xi32, #tpu.memory_space<smem>>
    %c0_i32_191 = arith.constant 0 : i32
    %364 = arith.maxsi %363, %c0_i32_191 : i32
    %c63_i32_192 = arith.constant 63 : i32
    %365 = arith.minsi %364, %c63_i32_192 : i32
    %366 = arith.index_cast %365 : i32 to index
    %c0_193 = arith.constant 0 : index
    %367 = vector.load %arg2[%366, %c0_193] : memref<64x128xf32, #tpu.memory_space<vmem>>, vector<1x128xf32>
    %368 = arith.addf %359, %367 : vector<1x128xf32>
    %c32_i32_194 = arith.constant 32 : i32
    %369 = arith.addi %0, %c32_i32_194 : i32
    %c7_i32_195 = arith.constant 7 : i32
    %370 = arith.addi %369, %c7_i32_195 : i32
    %371 = arith.index_cast %370 : i32 to index
    %372 = memref.load %arg1[%371] : memref<64xi32, #tpu.memory_space<smem>>
    %c0_i32_196 = arith.constant 0 : i32
    %373 = arith.maxsi %372, %c0_i32_196 : i32
    %c63_i32_197 = arith.constant 63 : i32
    %374 = arith.minsi %373, %c63_i32_197 : i32
    %375 = arith.index_cast %374 : i32 to index
    %c0_198 = arith.constant 0 : index
    %376 = vector.load %arg2[%375, %c0_198] : memref<64x128xf32, #tpu.memory_space<vmem>>, vector<1x128xf32>
    %377 = arith.addf %368, %376 : vector<1x128xf32>
    %cst_199 = arith.constant 1.250000e-01 : f32
    %378 = vector.broadcast %cst_199 : f32 to vector<1x128xf32>
    %379 = arith.mulf %377, %378 : vector<1x128xf32>
    %c4 = arith.constant 4 : index
    %c0_200 = arith.constant 0 : index
    %380 = vector.load %arg8[%c4, %c0_200] : memref<8x128xf32, #tpu.memory_space<vmem>>, vector<1x128xf32>
    tpu.vector_store %arg8[%c4, %c0_200], %379 {strides = array<i32>} : memref<8x128xf32, #tpu.memory_space<vmem>>, vector<1x128xf32>,
    %cst_201 = arith.constant 0.000000e+00 : f32
    %381 = vector.broadcast %cst_201 : f32 to vector<1x128xf32>
    %c40_i32 = arith.constant 40 : i32
    %382 = arith.addi %0, %c40_i32 : i32
    %c0_i32_202 = arith.constant 0 : i32
    %383 = arith.addi %382, %c0_i32_202 : i32
    %384 = arith.index_cast %383 : i32 to index
    %385 = memref.load %arg1[%384] : memref<64xi32, #tpu.memory_space<smem>>
    %c0_i32_203 = arith.constant 0 : i32
    %386 = arith.maxsi %385, %c0_i32_203 : i32
    %c63_i32_204 = arith.constant 63 : i32
    %387 = arith.minsi %386, %c63_i32_204 : i32
    %388 = arith.index_cast %387 : i32 to index
    %c0_205 = arith.constant 0 : index
    %389 = vector.load %arg2[%388, %c0_205] : memref<64x128xf32, #tpu.memory_space<vmem>>, vector<1x128xf32>
    %390 = arith.addf %381, %389 : vector<1x128xf32>
    %c40_i32_206 = arith.constant 40 : i32
    %391 = arith.addi %0, %c40_i32_206 : i32
    %c1_i32_207 = arith.constant 1 : i32
    %392 = arith.addi %391, %c1_i32_207 : i32
    %393 = arith.index_cast %392 : i32 to index
    %394 = memref.load %arg1[%393] : memref<64xi32, #tpu.memory_space<smem>>
    %c0_i32_208 = arith.constant 0 : i32
    %395 = arith.maxsi %394, %c0_i32_208 : i32
    %c63_i32_209 = arith.constant 63 : i32
    %396 = arith.minsi %395, %c63_i32_209 : i32
    %397 = arith.index_cast %396 : i32 to index
    %c0_210 = arith.constant 0 : index
    %398 = vector.load %arg2[%397, %c0_210] : memref<64x128xf32, #tpu.memory_space<vmem>>, vector<1x128xf32>
    %399 = arith.addf %390, %398 : vector<1x128xf32>
    %c40_i32_211 = arith.constant 40 : i32
    %400 = arith.addi %0, %c40_i32_211 : i32
    %c2_i32_212 = arith.constant 2 : i32
    %401 = arith.addi %400, %c2_i32_212 : i32
    %402 = arith.index_cast %401 : i32 to index
    %403 = memref.load %arg1[%402] : memref<64xi32, #tpu.memory_space<smem>>
    %c0_i32_213 = arith.constant 0 : i32
    %404 = arith.maxsi %403, %c0_i32_213 : i32
    %c63_i32_214 = arith.constant 63 : i32
    %405 = arith.minsi %404, %c63_i32_214 : i32
    %406 = arith.index_cast %405 : i32 to index
    %c0_215 = arith.constant 0 : index
    %407 = vector.load %arg2[%406, %c0_215] : memref<64x128xf32, #tpu.memory_space<vmem>>, vector<1x128xf32>
    %408 = arith.addf %399, %407 : vector<1x128xf32>
    %c40_i32_216 = arith.constant 40 : i32
    %409 = arith.addi %0, %c40_i32_216 : i32
    %c3_i32_217 = arith.constant 3 : i32
    %410 = arith.addi %409, %c3_i32_217 : i32
    %411 = arith.index_cast %410 : i32 to index
    %412 = memref.load %arg1[%411] : memref<64xi32, #tpu.memory_space<smem>>
    %c0_i32_218 = arith.constant 0 : i32
    %413 = arith.maxsi %412, %c0_i32_218 : i32
    %c63_i32_219 = arith.constant 63 : i32
    %414 = arith.minsi %413, %c63_i32_219 : i32
    %415 = arith.index_cast %414 : i32 to index
    %c0_220 = arith.constant 0 : index
    %416 = vector.load %arg2[%415, %c0_220] : memref<64x128xf32, #tpu.memory_space<vmem>>, vector<1x128xf32>
    %417 = arith.addf %408, %416 : vector<1x128xf32>
    %c40_i32_221 = arith.constant 40 : i32
    %418 = arith.addi %0, %c40_i32_221 : i32
    %c4_i32_222 = arith.constant 4 : i32
    %419 = arith.addi %418, %c4_i32_222 : i32
    %420 = arith.index_cast %419 : i32 to index
    %421 = memref.load %arg1[%420] : memref<64xi32, #tpu.memory_space<smem>>
    %c0_i32_223 = arith.constant 0 : i32
    %422 = arith.maxsi %421, %c0_i32_223 : i32
    %c63_i32_224 = arith.constant 63 : i32
    %423 = arith.minsi %422, %c63_i32_224 : i32
    %424 = arith.index_cast %423 : i32 to index
    %c0_225 = arith.constant 0 : index
    %425 = vector.load %arg2[%424, %c0_225] : memref<64x128xf32, #tpu.memory_space<vmem>>, vector<1x128xf32>
    %426 = arith.addf %417, %425 : vector<1x128xf32>
    %c40_i32_226 = arith.constant 40 : i32
    %427 = arith.addi %0, %c40_i32_226 : i32
    %c5_i32_227 = arith.constant 5 : i32
    %428 = arith.addi %427, %c5_i32_227 : i32
    %429 = arith.index_cast %428 : i32 to index
    %430 = memref.load %arg1[%429] : memref<64xi32, #tpu.memory_space<smem>>
    %c0_i32_228 = arith.constant 0 : i32
    %431 = arith.maxsi %430, %c0_i32_228 : i32
    %c63_i32_229 = arith.constant 63 : i32
    %432 = arith.minsi %431, %c63_i32_229 : i32
    %433 = arith.index_cast %432 : i32 to index
    %c0_230 = arith.constant 0 : index
    %434 = vector.load %arg2[%433, %c0_230] : memref<64x128xf32, #tpu.memory_space<vmem>>, vector<1x128xf32>
    %435 = arith.addf %426, %434 : vector<1x128xf32>
    %c40_i32_231 = arith.constant 40 : i32
    %436 = arith.addi %0, %c40_i32_231 : i32
    %c6_i32_232 = arith.constant 6 : i32
    %437 = arith.addi %436, %c6_i32_232 : i32
    %438 = arith.index_cast %437 : i32 to index
    %439 = memref.load %arg1[%438] : memref<64xi32, #tpu.memory_space<smem>>
    %c0_i32_233 = arith.constant 0 : i32
    %440 = arith.maxsi %439, %c0_i32_233 : i32
    %c63_i32_234 = arith.constant 63 : i32
    %441 = arith.minsi %440, %c63_i32_234 : i32
    %442 = arith.index_cast %441 : i32 to index
    %c0_235 = arith.constant 0 : index
    %443 = vector.load %arg2[%442, %c0_235] : memref<64x128xf32, #tpu.memory_space<vmem>>, vector<1x128xf32>
    %444 = arith.addf %435, %443 : vector<1x128xf32>
    %c40_i32_236 = arith.constant 40 : i32
    %445 = arith.addi %0, %c40_i32_236 : i32
    %c7_i32_237 = arith.constant 7 : i32
    %446 = arith.addi %445, %c7_i32_237 : i32
    %447 = arith.index_cast %446 : i32 to index
    %448 = memref.load %arg1[%447] : memref<64xi32, #tpu.memory_space<smem>>
    %c0_i32_238 = arith.constant 0 : i32
    %449 = arith.maxsi %448, %c0_i32_238 : i32
    %c63_i32_239 = arith.constant 63 : i32
    %450 = arith.minsi %449, %c63_i32_239 : i32
    %451 = arith.index_cast %450 : i32 to index
    %c0_240 = arith.constant 0 : index
    %452 = vector.load %arg2[%451, %c0_240] : memref<64x128xf32, #tpu.memory_space<vmem>>, vector<1x128xf32>
    %453 = arith.addf %444, %452 : vector<1x128xf32>
    %cst_241 = arith.constant 1.250000e-01 : f32
    %454 = vector.broadcast %cst_241 : f32 to vector<1x128xf32>
    %455 = arith.mulf %453, %454 : vector<1x128xf32>
    %c5 = arith.constant 5 : index
    %c0_242 = arith.constant 0 : index
    %456 = vector.load %arg8[%c5, %c0_242] : memref<8x128xf32, #tpu.memory_space<vmem>>, vector<1x128xf32>
    tpu.vector_store %arg8[%c5, %c0_242], %455 {strides = array<i32>} : memref<8x128xf32, #tpu.memory_space<vmem>>, vector<1x128xf32>,
    %cst_243 = arith.constant 0.000000e+00 : f32
    %457 = vector.broadcast %cst_243 : f32 to vector<1x128xf32>
    %c48_i32 = arith.constant 48 : i32
    %458 = arith.addi %0, %c48_i32 : i32
    %c0_i32_244 = arith.constant 0 : i32
    %459 = arith.addi %458, %c0_i32_244 : i32
    %460 = arith.index_cast %459 : i32 to index
    %461 = memref.load %arg1[%460] : memref<64xi32, #tpu.memory_space<smem>>
    %c0_i32_245 = arith.constant 0 : i32
    %462 = arith.maxsi %461, %c0_i32_245 : i32
    %c63_i32_246 = arith.constant 63 : i32
    %463 = arith.minsi %462, %c63_i32_246 : i32
    %464 = arith.index_cast %463 : i32 to index
    %c0_247 = arith.constant 0 : index
    %465 = vector.load %arg2[%464, %c0_247] : memref<64x128xf32, #tpu.memory_space<vmem>>, vector<1x128xf32>
    %466 = arith.addf %457, %465 : vector<1x128xf32>
    %c48_i32_248 = arith.constant 48 : i32
    %467 = arith.addi %0, %c48_i32_248 : i32
    %c1_i32_249 = arith.constant 1 : i32
    %468 = arith.addi %467, %c1_i32_249 : i32
    %469 = arith.index_cast %468 : i32 to index
    %470 = memref.load %arg1[%469] : memref<64xi32, #tpu.memory_space<smem>>
    %c0_i32_250 = arith.constant 0 : i32
    %471 = arith.maxsi %470, %c0_i32_250 : i32
    %c63_i32_251 = arith.constant 63 : i32
    %472 = arith.minsi %471, %c63_i32_251 : i32
    %473 = arith.index_cast %472 : i32 to index
    %c0_252 = arith.constant 0 : index
    %474 = vector.load %arg2[%473, %c0_252] : memref<64x128xf32, #tpu.memory_space<vmem>>, vector<1x128xf32>
    %475 = arith.addf %466, %474 : vector<1x128xf32>
    %c48_i32_253 = arith.constant 48 : i32
    %476 = arith.addi %0, %c48_i32_253 : i32
    %c2_i32_254 = arith.constant 2 : i32
    %477 = arith.addi %476, %c2_i32_254 : i32
    %478 = arith.index_cast %477 : i32 to index
    %479 = memref.load %arg1[%478] : memref<64xi32, #tpu.memory_space<smem>>
    %c0_i32_255 = arith.constant 0 : i32
    %480 = arith.maxsi %479, %c0_i32_255 : i32
    %c63_i32_256 = arith.constant 63 : i32
    %481 = arith.minsi %480, %c63_i32_256 : i32
    %482 = arith.index_cast %481 : i32 to index
    %c0_257 = arith.constant 0 : index
    %483 = vector.load %arg2[%482, %c0_257] : memref<64x128xf32, #tpu.memory_space<vmem>>, vector<1x128xf32>
    %484 = arith.addf %475, %483 : vector<1x128xf32>
    %c48_i32_258 = arith.constant 48 : i32
    %485 = arith.addi %0, %c48_i32_258 : i32
    %c3_i32_259 = arith.constant 3 : i32
    %486 = arith.addi %485, %c3_i32_259 : i32
    %487 = arith.index_cast %486 : i32 to index
    %488 = memref.load %arg1[%487] : memref<64xi32, #tpu.memory_space<smem>>
    %c0_i32_260 = arith.constant 0 : i32
    %489 = arith.maxsi %488, %c0_i32_260 : i32
    %c63_i32_261 = arith.constant 63 : i32
    %490 = arith.minsi %489, %c63_i32_261 : i32
    %491 = arith.index_cast %490 : i32 to index
    %c0_262 = arith.constant 0 : index
    %492 = vector.load %arg2[%491, %c0_262] : memref<64x128xf32, #tpu.memory_space<vmem>>, vector<1x128xf32>
    %493 = arith.addf %484, %492 : vector<1x128xf32>
    %c48_i32_263 = arith.constant 48 : i32
    %494 = arith.addi %0, %c48_i32_263 : i32
    %c4_i32_264 = arith.constant 4 : i32
    %495 = arith.addi %494, %c4_i32_264 : i32
    %496 = arith.index_cast %495 : i32 to index
    %497 = memref.load %arg1[%496] : memref<64xi32, #tpu.memory_space<smem>>
    %c0_i32_265 = arith.constant 0 : i32
    %498 = arith.maxsi %497, %c0_i32_265 : i32
    %c63_i32_266 = arith.constant 63 : i32
    %499 = arith.minsi %498, %c63_i32_266 : i32
    %500 = arith.index_cast %499 : i32 to index
    %c0_267 = arith.constant 0 : index
    %501 = vector.load %arg2[%500, %c0_267] : memref<64x128xf32, #tpu.memory_space<vmem>>, vector<1x128xf32>
    %502 = arith.addf %493, %501 : vector<1x128xf32>
    %c48_i32_268 = arith.constant 48 : i32
    %503 = arith.addi %0, %c48_i32_268 : i32
    %c5_i32_269 = arith.constant 5 : i32
    %504 = arith.addi %503, %c5_i32_269 : i32
    %505 = arith.index_cast %504 : i32 to index
    %506 = memref.load %arg1[%505] : memref<64xi32, #tpu.memory_space<smem>>
    %c0_i32_270 = arith.constant 0 : i32
    %507 = arith.maxsi %506, %c0_i32_270 : i32
    %c63_i32_271 = arith.constant 63 : i32
    %508 = arith.minsi %507, %c63_i32_271 : i32
    %509 = arith.index_cast %508 : i32 to index
    %c0_272 = arith.constant 0 : index
    %510 = vector.load %arg2[%509, %c0_272] : memref<64x128xf32, #tpu.memory_space<vmem>>, vector<1x128xf32>
    %511 = arith.addf %502, %510 : vector<1x128xf32>
    %c48_i32_273 = arith.constant 48 : i32
    %512 = arith.addi %0, %c48_i32_273 : i32
    %c6_i32_274 = arith.constant 6 : i32
    %513 = arith.addi %512, %c6_i32_274 : i32
    %514 = arith.index_cast %513 : i32 to index
    %515 = memref.load %arg1[%514] : memref<64xi32, #tpu.memory_space<smem>>
    %c0_i32_275 = arith.constant 0 : i32
    %516 = arith.maxsi %515, %c0_i32_275 : i32
    %c63_i32_276 = arith.constant 63 : i32
    %517 = arith.minsi %516, %c63_i32_276 : i32
    %518 = arith.index_cast %517 : i32 to index
    %c0_277 = arith.constant 0 : index
    %519 = vector.load %arg2[%518, %c0_277] : memref<64x128xf32, #tpu.memory_space<vmem>>, vector<1x128xf32>
    %520 = arith.addf %511, %519 : vector<1x128xf32>
    %c48_i32_278 = arith.constant 48 : i32
    %521 = arith.addi %0, %c48_i32_278 : i32
    %c7_i32_279 = arith.constant 7 : i32
    %522 = arith.addi %521, %c7_i32_279 : i32
    %523 = arith.index_cast %522 : i32 to index
    %524 = memref.load %arg1[%523] : memref<64xi32, #tpu.memory_space<smem>>
    %c0_i32_280 = arith.constant 0 : i32
    %525 = arith.maxsi %524, %c0_i32_280 : i32
    %c63_i32_281 = arith.constant 63 : i32
    %526 = arith.minsi %525, %c63_i32_281 : i32
    %527 = arith.index_cast %526 : i32 to index
    %c0_282 = arith.constant 0 : index
    %528 = vector.load %arg2[%527, %c0_282] : memref<64x128xf32, #tpu.memory_space<vmem>>, vector<1x128xf32>
    %529 = arith.addf %520, %528 : vector<1x128xf32>
    %cst_283 = arith.constant 1.250000e-01 : f32
    %530 = vector.broadcast %cst_283 : f32 to vector<1x128xf32>
    %531 = arith.mulf %529, %530 : vector<1x128xf32>
    %c6 = arith.constant 6 : index
    %c0_284 = arith.constant 0 : index
    %532 = vector.load %arg8[%c6, %c0_284] : memref<8x128xf32, #tpu.memory_space<vmem>>, vector<1x128xf32>
    tpu.vector_store %arg8[%c6, %c0_284], %531 {strides = array<i32>} : memref<8x128xf32, #tpu.memory_space<vmem>>, vector<1x128xf32>,
    %cst_285 = arith.constant 0.000000e+00 : f32
    %533 = vector.broadcast %cst_285 : f32 to vector<1x128xf32>
    %c56_i32 = arith.constant 56 : i32
    %534 = arith.addi %0, %c56_i32 : i32
    %c0_i32_286 = arith.constant 0 : i32
    %535 = arith.addi %534, %c0_i32_286 : i32
    %536 = arith.index_cast %535 : i32 to index
    %537 = memref.load %arg1[%536] : memref<64xi32, #tpu.memory_space<smem>>
    %c0_i32_287 = arith.constant 0 : i32
    %538 = arith.maxsi %537, %c0_i32_287 : i32
    %c63_i32_288 = arith.constant 63 : i32
    %539 = arith.minsi %538, %c63_i32_288 : i32
    %540 = arith.index_cast %539 : i32 to index
    %c0_289 = arith.constant 0 : index
    %541 = vector.load %arg2[%540, %c0_289] : memref<64x128xf32, #tpu.memory_space<vmem>>, vector<1x128xf32>
    %542 = arith.addf %533, %541 : vector<1x128xf32>
    %c56_i32_290 = arith.constant 56 : i32
    %543 = arith.addi %0, %c56_i32_290 : i32
    %c1_i32_291 = arith.constant 1 : i32
    %544 = arith.addi %543, %c1_i32_291 : i32
    %545 = arith.index_cast %544 : i32 to index
    %546 = memref.load %arg1[%545] : memref<64xi32, #tpu.memory_space<smem>>
    %c0_i32_292 = arith.constant 0 : i32
    %547 = arith.maxsi %546, %c0_i32_292 : i32
    %c63_i32_293 = arith.constant 63 : i32
    %548 = arith.minsi %547, %c63_i32_293 : i32
    %549 = arith.index_cast %548 : i32 to index
    %c0_294 = arith.constant 0 : index
    %550 = vector.load %arg2[%549, %c0_294] : memref<64x128xf32, #tpu.memory_space<vmem>>, vector<1x128xf32>
    %551 = arith.addf %542, %550 : vector<1x128xf32>
    %c56_i32_295 = arith.constant 56 : i32
    %552 = arith.addi %0, %c56_i32_295 : i32
    %c2_i32_296 = arith.constant 2 : i32
    %553 = arith.addi %552, %c2_i32_296 : i32
    %554 = arith.index_cast %553 : i32 to index
    %555 = memref.load %arg1[%554] : memref<64xi32, #tpu.memory_space<smem>>
    %c0_i32_297 = arith.constant 0 : i32
    %556 = arith.maxsi %555, %c0_i32_297 : i32
    %c63_i32_298 = arith.constant 63 : i32
    %557 = arith.minsi %556, %c63_i32_298 : i32
    %558 = arith.index_cast %557 : i32 to index
    %c0_299 = arith.constant 0 : index
    %559 = vector.load %arg2[%558, %c0_299] : memref<64x128xf32, #tpu.memory_space<vmem>>, vector<1x128xf32>
    %560 = arith.addf %551, %559 : vector<1x128xf32>
    %c56_i32_300 = arith.constant 56 : i32
    %561 = arith.addi %0, %c56_i32_300 : i32
    %c3_i32_301 = arith.constant 3 : i32
    %562 = arith.addi %561, %c3_i32_301 : i32
    %563 = arith.index_cast %562 : i32 to index
    %564 = memref.load %arg1[%563] : memref<64xi32, #tpu.memory_space<smem>>
    %c0_i32_302 = arith.constant 0 : i32
    %565 = arith.maxsi %564, %c0_i32_302 : i32
    %c63_i32_303 = arith.constant 63 : i32
    %566 = arith.minsi %565, %c63_i32_303 : i32
    %567 = arith.index_cast %566 : i32 to index
    %c0_304 = arith.constant 0 : index
    %568 = vector.load %arg2[%567, %c0_304] : memref<64x128xf32, #tpu.memory_space<vmem>>, vector<1x128xf32>
    %569 = arith.addf %560, %568 : vector<1x128xf32>
    %c56_i32_305 = arith.constant 56 : i32
    %570 = arith.addi %0, %c56_i32_305 : i32
    %c4_i32_306 = arith.constant 4 : i32
    %571 = arith.addi %570, %c4_i32_306 : i32
    %572 = arith.index_cast %571 : i32 to index
    %573 = memref.load %arg1[%572] : memref<64xi32, #tpu.memory_space<smem>>
    %c0_i32_307 = arith.constant 0 : i32
    %574 = arith.maxsi %573, %c0_i32_307 : i32
    %c63_i32_308 = arith.constant 63 : i32
    %575 = arith.minsi %574, %c63_i32_308 : i32
    %576 = arith.index_cast %575 : i32 to index
    %c0_309 = arith.constant 0 : index
    %577 = vector.load %arg2[%576, %c0_309] : memref<64x128xf32, #tpu.memory_space<vmem>>, vector<1x128xf32>
    %578 = arith.addf %569, %577 : vector<1x128xf32>
    %c56_i32_310 = arith.constant 56 : i32
    %579 = arith.addi %0, %c56_i32_310 : i32
    %c5_i32_311 = arith.constant 5 : i32
    %580 = arith.addi %579, %c5_i32_311 : i32
    %581 = arith.index_cast %580 : i32 to index
    %582 = memref.load %arg1[%581] : memref<64xi32, #tpu.memory_space<smem>>
    %c0_i32_312 = arith.constant 0 : i32
    %583 = arith.maxsi %582, %c0_i32_312 : i32
    %c63_i32_313 = arith.constant 63 : i32
    %584 = arith.minsi %583, %c63_i32_313 : i32
    %585 = arith.index_cast %584 : i32 to index
    %c0_314 = arith.constant 0 : index
    %586 = vector.load %arg2[%585, %c0_314] : memref<64x128xf32, #tpu.memory_space<vmem>>, vector<1x128xf32>
    %587 = arith.addf %578, %586 : vector<1x128xf32>
    %c56_i32_315 = arith.constant 56 : i32
    %588 = arith.addi %0, %c56_i32_315 : i32
    %c6_i32_316 = arith.constant 6 : i32
    %589 = arith.addi %588, %c6_i32_316 : i32
    %590 = arith.index_cast %589 : i32 to index
    %591 = memref.load %arg1[%590] : memref<64xi32, #tpu.memory_space<smem>>
    %c0_i32_317 = arith.constant 0 : i32
    %592 = arith.maxsi %591, %c0_i32_317 : i32
    %c63_i32_318 = arith.constant 63 : i32
    %593 = arith.minsi %592, %c63_i32_318 : i32
    %594 = arith.index_cast %593 : i32 to index
    %c0_319 = arith.constant 0 : index
    %595 = vector.load %arg2[%594, %c0_319] : memref<64x128xf32, #tpu.memory_space<vmem>>, vector<1x128xf32>
    %596 = arith.addf %587, %595 : vector<1x128xf32>
    %c56_i32_320 = arith.constant 56 : i32
    %597 = arith.addi %0, %c56_i32_320 : i32
    %c7_i32_321 = arith.constant 7 : i32
    %598 = arith.addi %597, %c7_i32_321 : i32
    %599 = arith.index_cast %598 : i32 to index
    %600 = memref.load %arg1[%599] : memref<64xi32, #tpu.memory_space<smem>>
    %c0_i32_322 = arith.constant 0 : i32
    %601 = arith.maxsi %600, %c0_i32_322 : i32
    %c63_i32_323 = arith.constant 63 : i32
    %602 = arith.minsi %601, %c63_i32_323 : i32
    %603 = arith.index_cast %602 : i32 to index
    %c0_324 = arith.constant 0 : index
    %604 = vector.load %arg2[%603, %c0_324] : memref<64x128xf32, #tpu.memory_space<vmem>>, vector<1x128xf32>
    %605 = arith.addf %596, %604 : vector<1x128xf32>
    %cst_325 = arith.constant 1.250000e-01 : f32
    %606 = vector.broadcast %cst_325 : f32 to vector<1x128xf32>
    %607 = arith.mulf %605, %606 : vector<1x128xf32>
    %c7 = arith.constant 7 : index
    %c0_326 = arith.constant 0 : index
    %608 = vector.load %arg8[%c7, %c0_326] : memref<8x128xf32, #tpu.memory_space<vmem>>, vector<1x128xf32>
    tpu.vector_store %arg8[%c7, %c0_326], %607 {strides = array<i32>} : memref<8x128xf32, #tpu.memory_space<vmem>>, vector<1x128xf32>,
    %c0_327 = arith.constant 0 : index
    %c0_328 = arith.constant 0 : index
    %609 = vector.load %arg8[%c0_327, %c0_328] : memref<8x128xf32, #tpu.memory_space<vmem>>, vector<8x128xf32>
    %c0_329 = arith.constant 0 : index
    %c0_330 = arith.constant 0 : index
    %610 = vector.load %arg3[%c0_329, %c0_330] : memref<128x128xf32, #tpu.memory_space<vmem>>, vector<128x128xf32>
    %cst_331 = arith.constant dense<0.000000e+00> : vector<8x128xf32>
    %611 = tpu.matmul %609, %610, %cst_331 {dimension_numbers = #tpu.dot_dimension_numbers<[1], [0], [0], [1], [0, 0, 1, 1], [], []>} : vector<8x128xf32>, vector<128x128xf32>, vector<8x128xf32> -> vector<8x128xf32>
    %c0_332 = arith.constant 0 : index
    %c0_333 = arith.constant 0 : index
    %612 = vector.load %arg4[%c0_332, %c0_333] : memref<1x128xf32, #tpu.memory_space<vmem>>, vector<1x128xf32>
    %613 = vector.broadcast %612 : vector<1x128xf32> to vector<8x128xf32>
    %614 = arith.addf %611, %613 : vector<8x128xf32>
    %615 = math.tanh %614 : vector<8x128xf32>
    %c0_334 = arith.constant 0 : index
    %c0_335 = arith.constant 0 : index
    %616 = vector.load %arg5[%c0_334, %c0_335] : memref<128x128xf32, #tpu.memory_space<vmem>>, vector<128x128xf32>
    %cst_336 = arith.constant dense<0.000000e+00> : vector<8x128xf32>
    %617 = tpu.matmul %615, %616, %cst_336 {dimension_numbers = #tpu.dot_dimension_numbers<[1], [0], [0], [1], [0, 0, 1, 1], [], []>} : vector<8x128xf32>, vector<128x128xf32>, vector<8x128xf32> -> vector<8x128xf32>
    %c0_337 = arith.constant 0 : index
    %c0_338 = arith.constant 0 : index
    %618 = vector.load %arg6[%c0_337, %c0_338] : memref<1x128xf32, #tpu.memory_space<vmem>>, vector<1x128xf32>
    %619 = vector.broadcast %618 : vector<1x128xf32> to vector<8x128xf32>
    %620 = arith.addf %617, %619 : vector<8x128xf32>
    %cst_339 = arith.constant dense<0xFF800000> : vector<8xf32>
    %621 = vector.multi_reduction <maximumf>, %620, %cst_339 [1] : vector<8x128xf32> to vector<8xf32>
    %622 = vector.shape_cast %621 : vector<8xf32> to vector<8x1xf32>
    %623 = vector.broadcast %622 : vector<8x1xf32> to vector<8x128xf32>
    %624 = arith.subf %620, %623 : vector<8x128xf32>
    %625 = math.exp %624 : vector<8x128xf32>
    %cst_340 = arith.constant dense<0.000000e+00> : vector<8xf32>
    %626 = vector.multi_reduction <add>, %625, %cst_340 [1] : vector<8x128xf32> to vector<8xf32>
    %627 = vector.shape_cast %626 : vector<8xf32> to vector<8x1xf32>
    %628 = vector.broadcast %627 : vector<8x1xf32> to vector<8x128xf32>
    %629 = arith.divf %625, %628 : vector<8x128xf32>
    %c0_341 = arith.constant 0 : index
    %c0_342 = arith.constant 0 : index
    %630 = vector.load %arg7[%c0_341, %c0_342] : memref<8x128xf32, #tpu.memory_space<vmem>>, vector<8x128xf32>
    tpu.vector_store %arg7[%c0_341, %c0_342], %629 {strides = array<i32>} : memref<8x128xf32, #tpu.memory_space<vmem>>, vector<8x128xf32>,
    return
  }
  func.func @transform_0(%arg0: i32, %arg1: memref<64xi32, #tpu.memory_space<smem>>) -> (i32, i32) {
    %c0_i32 = arith.constant 0 : i32
    %c0_i32_0 = arith.constant 0 : i32
    %c0_i32_1 = arith.constant 0 : i32
    return %c0_i32, %c0_i32_0 : i32, i32
  }
  func.func @transform_1(%arg0: i32, %arg1: memref<64xi32, #tpu.memory_space<smem>>) -> (i32, i32) {
    %c0_i32 = arith.constant 0 : i32
    %c0_i32_0 = arith.constant 0 : i32
    %c0_i32_1 = arith.constant 0 : i32
    return %c0_i32, %c0_i32_0 : i32, i32
  }
  func.func @transform_2(%arg0: i32, %arg1: memref<64xi32, #tpu.memory_space<smem>>) -> (i32, i32) {
    %c0_i32 = arith.constant 0 : i32
    %c0_i32_0 = arith.constant 0 : i32
    %c0_i32_1 = arith.constant 0 : i32
    return %c0_i32, %c0_i32_0 : i32, i32
  }
  func.func @transform_3(%arg0: i32, %arg1: memref<64xi32, #tpu.memory_space<smem>>) -> (i32, i32) {
    %c0_i32 = arith.constant 0 : i32
    %c0_i32_0 = arith.constant 0 : i32
    %c0_i32_1 = arith.constant 0 : i32
    return %c0_i32, %c0_i32_0 : i32, i32
  }
  func.func @transform_4(%arg0: i32, %arg1: memref<64xi32, #tpu.memory_space<smem>>) -> (i32, i32) {
    %c0_i32 = arith.constant 0 : i32
    %c0_i32_0 = arith.constant 0 : i32
    %c0_i32_1 = arith.constant 0 : i32
    return %c0_i32, %c0_i32_0 : i32, i32
  }
  func.func @transform_5(%arg0: i32, %arg1: memref<64xi32, #tpu.memory_space<smem>>) -> (i32, i32) {
    %c0_i32 = arith.constant 0 : i32
    %c0_i32_0 = arith.constant 0 : i32
    return %arg0, %c0_i32 : i32, i32
  }
}

</mosaic_0001>

<llo_original>
// kernel: tpu_custom_call.1
$region0: #{tpu_custom_call.1}
  #allocation0 [shape = 'u32[]', space=smem, size = 0x4, offset = 0x4, fixed_abs, tag = 'smem constant byte address 0x4 - core index']
  #allocation1 [shape = 'u32[144,128]{1,0:T(1,128)}', space=vmem, size = 0x12000, scoped, tag = 'internal scratch']
  #allocation2 [shape = 'f32[8,128]{1,0:T(8,128)}', space=vmem, size = 0x1000, scoped, tag = 'scratch operand']
  #allocation3 [shape = 's32[1]{0}', space=sflag, size = 0x4, scoped, tag = 'scoped memory for tpu_custom_call.1']
  #allocation4 [shape = 'u8[512]{0}', space=smem, size = 0x200, scoped, tag = 'prefetched SMEM operand 0']
  %s0 = inlined_call_operand.hbm [shape: s32[64], index: 0, kind: input, shape index: {}]
  %s1 = inlined_call_operand.hbm [shape: f32[64,128], index: 1, kind: input, shape index: {}]
  %s2 = inlined_call_operand.hbm [shape: f32[128,128], index: 2, kind: input, shape index: {}]
  %s3 = inlined_call_operand.vmem [shape: f32[1,128], index: 3, kind: input, shape index: {}]
  %s4 = inlined_call_operand.hbm [shape: f32[128,128], index: 4, kind: input, shape index: {}]
  %s5 = inlined_call_operand.vmem [shape: f32[1,128], index: 5, kind: input, shape index: {}]
  %s6 = inlined_call_operand.hbm [shape: f32[8,128], index: 6, kind: output, shape index: {}]
  %s7 = sld [smem:[#allocation0]]
  $region42: #{tpu_custom_call.1} parent=0
    _
  %s9 = ssub.s32 1, %s7
  %s10 = scalar_select 0, %s9, %s7
  %12 = dma.hbm_to_smem %s0, 16, [#allocation4], [#allocation3]
  %13 = dma.done [#allocation3], 16
  %14 = sfence
  $region1: #{tpu_custom_call.1} parent=0
    #allocation5 [shape = 'u8[32768]{0}', space=vmem, size = 0x8000, scoped, tag = 'input window, operand 1, single buffered']
    #allocation6 [shape = 's32[1]{0}', space=sflag, size = 0x4, scoped, tag = 'scoped memory for tpu_custom_call.1']
    #allocation7 [shape = 's32[1]{0}', space=sflag, size = 0x4, scoped, tag = 'scoped memory for tpu_custom_call.1']
    #allocation8 [shape = 'u8[65536]{0}', space=vmem, size = 0x10000, scoped, tag = 'input window, operand 2, single buffered']
    #allocation9 [shape = 's32[1]{0}', space=sflag, size = 0x4, scoped, tag = 'scoped memory for tpu_custom_call.1']
    #allocation10 [shape = 'u8[65536]{0}', space=vmem, size = 0x10000, scoped, tag = 'input window, operand 4, single buffered']
    #allocation11 [shape = 'u8[4096]{0}', space=vmem, size = 0x1000, scoped, tag = 'output window, operand 0, single buffered']
    %15 = vsyncpa [#allocation6], 0
    %16 = vsyncpa [#allocation9], 0
    %17 = vsyncpa [#allocation7], 0
    // Predicated region
    $region2: #{tpu_custom_call.1} parent=1 // pred_check
      _
    $region3: #{tpu_custom_call.1} parent=1 // pred_check_branch
      %19 = sbr.rel (0) target = $region5
    $region4: #{tpu_custom_call.1} parent=1 // pred_region
      %s21 = ssub.s32 1024, 1024
      %22 = vsyncadd [#allocation6], %s21
      %s23 = sshll.u32 [#allocation5], 4
      %s24 = int_to_ptr.vmem [resolvable:$true] %s23
      %29 = dma.hbm_to_vmem [thread:$0]  %s1, 1024, %s24, [#allocation6], 128, 128, 8
    $region5: #{tpu_custom_call.1} parent=1 // pred_fallthru
      _
    // Predicated region
    $region6: #{tpu_custom_call.1} parent=1 // pred_check
      _
    $region7: #{tpu_custom_call.1} parent=1 // pred_check_branch
      %31 = sbr.rel (0) target = $region9
    $region8: #{tpu_custom_call.1} parent=1 // pred_region
      %s33 = ssub.s32 2048, 2048
      %34 = vsyncadd [#allocation9], %s33
      %s35 = sshll.u32 [#allocation8], 4
      %s36 = int_to_ptr.vmem [resolvable:$true] %s35
      %41 = dma.hbm_to_vmem [thread:$0]  %s2, 2048, %s36, [#allocation9], 128, 128, 8
    $region9: #{tpu_custom_call.1} parent=1 // pred_fallthru
      _
    // Predicated region
    $region10: #{tpu_custom_call.1} parent=1 // pred_check
      _
    $region11: #{tpu_custom_call.1} parent=1 // pred_check_branch
      %43 = sbr.rel (0) target = $region13
    $region12: #{tpu_custom_call.1} parent=1 // pred_region
      _
    $region13: #{tpu_custom_call.1} parent=1 // pred_fallthru
      _
    // Predicated region
    $region14: #{tpu_custom_call.1} parent=1 // pred_check
      _
    $region15: #{tpu_custom_call.1} parent=1 // pred_check_branch
      %45 = sbr.rel (0) target = $region17
    $region16: #{tpu_custom_call.1} parent=1 // pred_region
      %s47 = ssub.s32 2048, 2048
      %48 = vsyncadd [#allocation9], %s47
      %s49 = sshll.u32 [#allocation10], 4
      %s50 = int_to_ptr.vmem [resolvable:$true] %s49
      %55 = dma.hbm_to_vmem [thread:$0]  %s4, 2048, %s50, [#allocation9], 128, 128, 8
    $region17: #{tpu_custom_call.1} parent=1 // pred_fallthru
      _
    // Predicated region
    $region18: #{tpu_custom_call.1} parent=1 // pred_check
      _
    $region19: #{tpu_custom_call.1} parent=1 // pred_check_branch
      %57 = sbr.rel (0) target = $region21
    $region20: #{tpu_custom_call.1} parent=1 // pred_region
      _
    $region21: #{tpu_custom_call.1} parent=1 // pred_fallthru
      _
    // Predicated region
    $region22: #{tpu_custom_call.1} parent=1 // pred_check
      _
    $region23: #{tpu_custom_call.1} parent=1 // pred_check_branch
      %59 = sbr.rel (0) target = $region25
    $region24: #{tpu_custom_call.1} parent=1 // pred_region
      %60 = dma.done [#allocation6], 1024
    $region25: #{tpu_custom_call.1} parent=1 // pred_fallthru
      _
    // Predicated region
    $region26: #{tpu_custom_call.1} parent=1 // pred_check
      _
    $region27: #{tpu_custom_call.1} parent=1 // pred_check_branch
      %62 = sbr.rel (0) target = $region29
    $region28: #{tpu_custom_call.1} parent=1 // pred_region
      %63 = dma.done [#allocation9], 2048
    $region29: #{tpu_custom_call.1} parent=1 // pred_fallthru
      _
    // Predicated region
    $region30: #{tpu_custom_call.1} parent=1 // pred_check
      _
    $region31: #{tpu_custom_call.1} parent=1 // pred_check_branch
      %65 = sbr.rel (0) target = $region33
    $region32: #{tpu_custom_call.1} parent=1 // pred_region
      %66 = dma.done [#allocation9], 2048
    $region33: #{tpu_custom_call.1} parent=1 // pred_fallthru
      _
    %s67 = smul.u32 0, 64
    %s68 = sld [smem:[#allocation4 + %s67]]
    %p69 = scmp.gt.s32.totalorder %s68, 0
    %s70 = scalar_select %p69, %s68, 0
    %p71 = scmp.lt.s32.totalorder %s70, 63
    %s72 = scalar_select %p71, %s70, 63
    %s73 = scalar_lea.vmem [#allocation5], %s72
    %v74 = vld [vmem:[%s73] sm:$0x1]
    %v75 = vadd.f32 %v74, 0.0
    %s76 = sadd.s32 %s67, 1
    %s77 = sld [smem:[#allocation4 + %s76]]
    %p78 = scmp.gt.s32.totalorder %s77, 0
    %s79 = scalar_select %p78, %s77, 0
    %p80 = scmp.lt.s32.totalorder %s79, 63
    %s81 = scalar_select %p80, %s79, 63
    %s82 = scalar_lea.vmem [#allocation5], %s81
    %v83 = vld [vmem:[%s82] sm:$0x1]
    %v84 = vadd.f32 %v75, %v83
    %s85 = sadd.s32 %s67, 2
    %s86 = sld [smem:[#allocation4 + %s85]]
    %p87 = scmp.gt.s32.totalorder %s86, 0
    %s88 = scalar_select %p87, %s86, 0
    %p89 = scmp.lt.s32.totalorder %s88, 63
    %s90 = scalar_select %p89, %s88, 63
    %s91 = scalar_lea.vmem [#allocation5], %s90
    %v92 = vld [vmem:[%s91] sm:$0x1]
    %v93 = vadd.f32 %v84, %v92
    %s94 = sadd.s32 %s67, 3
    %s95 = sld [smem:[#allocation4 + %s94]]
    %p96 = scmp.gt.s32.totalorder %s95, 0
    %s97 = scalar_select %p96, %s95, 0
    %p98 = scmp.lt.s32.totalorder %s97, 63
    %s99 = scalar_select %p98, %s97, 63
    %s100 = scalar_lea.vmem [#allocation5], %s99
    %v101 = vld [vmem:[%s100] sm:$0x1]
    %v102 = vadd.f32 %v93, %v101
    %s103 = sadd.s32 %s67, 4
    %s104 = sld [smem:[#allocation4 + %s103]]
    %p105 = scmp.gt.s32.totalorder %s104, 0
    %s106 = scalar_select %p105, %s104, 0
    %p107 = scmp.lt.s32.totalorder %s106, 63
    %s108 = scalar_select %p107, %s106, 63
    %s109 = scalar_lea.vmem [#allocation5], %s108
    %v110 = vld [vmem:[%s109] sm:$0x1]
    %v111 = vadd.f32 %v102, %v110
    %s112 = sadd.s32 %s67, 5
    %s113 = sld [smem:[#allocation4 + %s112]]
    %p114 = scmp.gt.s32.totalorder %s113, 0
    %s115 = scalar_select %p114, %s113, 0
    %p116 = scmp.lt.s32.totalorder %s115, 63
    %s117 = scalar_select %p116, %s115, 63
    %s118 = scalar_lea.vmem [#allocation5], %s117
    %v119 = vld [vmem:[%s118] sm:$0x1]
    %v120 = vadd.f32 %v111, %v119
    %s121 = sadd.s32 %s67, 6
    %s122 = sld [smem:[#allocation4 + %s121]]
    %p123 = scmp.gt.s32.totalorder %s122, 0
    %s124 = scalar_select %p123, %s122, 0
    %p125 = scmp.lt.s32.totalorder %s124, 63
    %s126 = scalar_select %p125, %s124, 63
    %s127 = scalar_lea.vmem [#allocation5], %s126
    %v128 = vld [vmem:[%s127] sm:$0x1]
    %v129 = vadd.f32 %v120, %v128
    %s130 = sadd.s32 %s67, 7
    %s131 = sld [smem:[#allocation4 + %s130]]
    %p132 = scmp.gt.s32.totalorder %s131, 0
    %s133 = scalar_select %p132, %s131, 0
    %p134 = scmp.lt.s32.totalorder %s133, 63
    %s135 = scalar_select %p134, %s133, 63
    %s136 = scalar_lea.vmem [#allocation5], %s135
    %v137 = vld [vmem:[%s136] sm:$0x1]
    %v138 = vadd.f32 %v129, %v137
    %v139 = vmul.f32 %v138, 0.125
    %140 = vst [vmem:[#allocation2] sm:$0x1] %v139
    %s141 = sadd.s32 %s67, 8
    %s142 = sld [smem:[#allocation4 + %s141]]
    %p143 = scmp.gt.s32.totalorder %s142, 0
    %s144 = scalar_select %p143, %s142, 0
    %p145 = scmp.lt.s32.totalorder %s144, 63
    %s146 = scalar_select %p145, %s144, 63
    %s147 = scalar_lea.vmem [#allocation5], %s146
    %v148 = vld [vmem:[%s147] sm:$0x1]
    %v149 = vadd.f32 %v148, 0.0
    %s150 = sadd.s32 %s67, 9
    %s151 = sld [smem:[#allocation4 + %s150]]
    %p152 = scmp.gt.s32.totalorder %s151, 0
    %s153 = scalar_select %p152, %s151, 0
    %p154 = scmp.lt.s32.totalorder %s153, 63
    %s155 = scalar_select %p154, %s153, 63
    %s156 = scalar_lea.vmem [#allocation5], %s155
    %v157 = vld [vmem:[%s156] sm:$0x1]
    %v158 = vadd.f32 %v149, %v157
    %s159 = sadd.s32 %s67, 10
    %s160 = sld [smem:[#allocation4 + %s159]]
    %p161 = scmp.gt.s32.totalorder %s160, 0
    %s162 = scalar_select %p161, %s160, 0
    %p163 = scmp.lt.s32.totalorder %s162, 63
    %s164 = scalar_select %p163, %s162, 63
    %s165 = scalar_lea.vmem [#allocation5], %s164
    %v166 = vld [vmem:[%s165] sm:$0x1]
    %v167 = vadd.f32 %v158, %v166
    %s168 = sadd.s32 %s67, 11
    %s169 = sld [smem:[#allocation4 + %s168]]
    %p170 = scmp.gt.s32.totalorder %s169, 0
    %s171 = scalar_select %p170, %s169, 0
    %p172 = scmp.lt.s32.totalorder %s171, 63
    %s173 = scalar_select %p172, %s171, 63
    %s174 = scalar_lea.vmem [#allocation5], %s173
    %v175 = vld [vmem:[%s174] sm:$0x1]
    %v176 = vadd.f32 %v167, %v175
    %s177 = sadd.s32 %s67, 12
    %s178 = sld [smem:[#allocation4 + %s177]]
    %p179 = scmp.gt.s32.totalorder %s178, 0
    %s180 = scalar_select %p179, %s178, 0
    %p181 = scmp.lt.s32.totalorder %s180, 63
    %s182 = scalar_select %p181, %s180, 63
    %s183 = scalar_lea.vmem [#allocation5], %s182
    %v184 = vld [vmem:[%s183] sm:$0x1]
    %v185 = vadd.f32 %v176, %v184
    %s186 = sadd.s32 %s67, 13
    %s187 = sld [smem:[#allocation4 + %s186]]
    %p188 = scmp.gt.s32.totalorder %s187, 0
    %s189 = scalar_select %p188, %s187, 0
    %p190 = scmp.lt.s32.totalorder %s189, 63
    %s191 = scalar_select %p190, %s189, 63
    %s192 = scalar_lea.vmem [#allocation5], %s191
    %v193 = vld [vmem:[%s192] sm:$0x1]
    %v194 = vadd.f32 %v185, %v193
    %s195 = sadd.s32 %s67, 14
    %s196 = sld [smem:[#allocation4 + %s195]]
    %p197 = scmp.gt.s32.totalorder %s196, 0
    %s198 = scalar_select %p197, %s196, 0
    %p199 = scmp.lt.s32.totalorder %s198, 63
    %s200 = scalar_select %p199, %s198, 63
    %s201 = scalar_lea.vmem [#allocation5], %s200
    %v202 = vld [vmem:[%s201] sm:$0x1]
    %v203 = vadd.f32 %v194, %v202
    %s204 = sadd.s32 %s67, 15
    %s205 = sld [smem:[#allocation4 + %s204]]
    %p206 = scmp.gt.s32.totalorder %s205, 0
    %s207 = scalar_select %p206, %s205, 0
    %p208 = scmp.lt.s32.totalorder %s207, 63
    %s209 = scalar_select %p208, %s207, 63
    %s210 = scalar_lea.vmem [#allocation5], %s209
    %v211 = vld [vmem:[%s210] sm:$0x1]
    %v212 = vadd.f32 %v203, %v211
    %v213 = vmul.f32 %v212, 0.125
    %214 = vst [vmem:[#allocation2 + $0x1] sm:$0x1] %v213
    %s215 = sadd.s32 %s67, 16
    %s216 = sld [smem:[#allocation4 + %s215]]
    %p217 = scmp.gt.s32.totalorder %s216, 0
    %s218 = scalar_select %p217, %s216, 0
    %p219 = scmp.lt.s32.totalorder %s218, 63
    %s220 = scalar_select %p219, %s218, 63
    %s221 = scalar_lea.vmem [#allocation5], %s220
    %v222 = vld [vmem:[%s221] sm:$0x1]
    %v223 = vadd.f32 %v222, 0.0
    %s224 = sadd.s32 %s67, 17
    %s225 = sld [smem:[#allocation4 + %s224]]
    %p226 = scmp.gt.s32.totalorder %s225, 0
    %s227 = scalar_select %p226, %s225, 0
    %p228 = scmp.lt.s32.totalorder %s227, 63
    %s229 = scalar_select %p228, %s227, 63
    %s230 = scalar_lea.vmem [#allocation5], %s229
    %v231 = vld [vmem:[%s230] sm:$0x1]
    %v232 = vadd.f32 %v223, %v231
    %s233 = sadd.s32 %s67, 18
    %s234 = sld [smem:[#allocation4 + %s233]]
    %p235 = scmp.gt.s32.totalorder %s234, 0
    %s236 = scalar_select %p235, %s234, 0
    %p237 = scmp.lt.s32.totalorder %s236, 63
    %s238 = scalar_select %p237, %s236, 63
    %s239 = scalar_lea.vmem [#allocation5], %s238
    %v240 = vld [vmem:[%s239] sm:$0x1]
    %v241 = vadd.f32 %v232, %v240
    %s242 = sadd.s32 %s67, 19
    %s243 = sld [smem:[#allocation4 + %s242]]
    %p244 = scmp.gt.s32.totalorder %s243, 0
    %s245 = scalar_select %p244, %s243, 0
    %p246 = scmp.lt.s32.totalorder %s245, 63
    %s247 = scalar_select %p246, %s245, 63
    %s248 = scalar_lea.vmem [#allocation5], %s247
    %v249 = vld [vmem:[%s248] sm:$0x1]
    %v250 = vadd.f32 %v241, %v249
    %s251 = sadd.s32 %s67, 20
    %s252 = sld [smem:[#allocation4 + %s251]]
    %p253 = scmp.gt.s32.totalorder %s252, 0
    %s254 = scalar_select %p253, %s252, 0
    %p255 = scmp.lt.s32.totalorder %s254, 63
    %s256 = scalar_select %p255, %s254, 63
    %s257 = scalar_lea.vmem [#allocation5], %s256
    %v258 = vld [vmem:[%s257] sm:$0x1]
    %v259 = vadd.f32 %v250, %v258
    %s260 = sadd.s32 %s67, 21
    %s261 = sld [smem:[#allocation4 + %s260]]
    %p262 = scmp.gt.s32.totalorder %s261, 0
    %s263 = scalar_select %p262, %s261, 0
    %p264 = scmp.lt.s32.totalorder %s263, 63
    %s265 = scalar_select %p264, %s263, 63
    %s266 = scalar_lea.vmem [#allocation5], %s265
    %v267 = vld [vmem:[%s266] sm:$0x1]
    %v268 = vadd.f32 %v259, %v267
    %s269 = sadd.s32 %s67, 22
    %s270 = sld [smem:[#allocation4 + %s269]]
    %p271 = scmp.gt.s32.totalorder %s270, 0
    %s272 = scalar_select %p271, %s270, 0
    %p273 = scmp.lt.s32.totalorder %s272, 63
    %s274 = scalar_select %p273, %s272, 63
    %s275 = scalar_lea.vmem [#allocation5], %s274
    %v276 = vld [vmem:[%s275] sm:$0x1]
    %v277 = vadd.f32 %v268, %v276
    %s278 = sadd.s32 %s67, 23
    %s279 = sld [smem:[#allocation4 + %s278]]
    %p280 = scmp.gt.s32.totalorder %s279, 0
    %s281 = scalar_select %p280, %s279, 0
    %p282 = scmp.lt.s32.totalorder %s281, 63
    %s283 = scalar_select %p282, %s281, 63
    %s284 = scalar_lea.vmem [#allocation5], %s283
    %v285 = vld [vmem:[%s284] sm:$0x1]
    %v286 = vadd.f32 %v277, %v285
    %v287 = vmul.f32 %v286, 0.125
    %288 = vst [vmem:[#allocation2 + $0x2] sm:$0x1] %v287
    %s289 = sadd.s32 %s67, 24
    %s290 = sld [smem:[#allocation4 + %s289]]
    %p291 = scmp.gt.s32.totalorder %s290, 0
    %s292 = scalar_select %p291, %s290, 0
    %p293 = scmp.lt.s32.totalorder %s292, 63
    %s294 = scalar_select %p293, %s292, 63
    %s295 = scalar_lea.vmem [#allocation5], %s294
    %v296 = vld [vmem:[%s295] sm:$0x1]
    %v297 = vadd.f32 %v296, 0.0
    %s298 = sadd.s32 %s67, 25
    %s299 = sld [smem:[#allocation4 + %s298]]
    %p300 = scmp.gt.s32.totalorder %s299, 0
    %s301 = scalar_select %p300, %s299, 0
    %p302 = scmp.lt.s32.totalorder %s301, 63
    %s303 = scalar_select %p302, %s301, 63
    %s304 = scalar_lea.vmem [#allocation5], %s303
    %v305 = vld [vmem:[%s304] sm:$0x1]
    %v306 = vadd.f32 %v297, %v305
    %s307 = sadd.s32 %s67, 26
    %s308 = sld [smem:[#allocation4 + %s307]]
    %p309 = scmp.gt.s32.totalorder %s308, 0
    %s310 = scalar_select %p309, %s308, 0
    %p311 = scmp.lt.s32.totalorder %s310, 63
    %s312 = scalar_select %p311, %s310, 63
    %s313 = scalar_lea.vmem [#allocation5], %s312
    %v314 = vld [vmem:[%s313] sm:$0x1]
    %v315 = vadd.f32 %v306, %v314
    %s316 = sadd.s32 %s67, 27
    %s317 = sld [smem:[#allocation4 + %s316]]
    %p318 = scmp.gt.s32.totalorder %s317, 0
    %s319 = scalar_select %p318, %s317, 0
    %p320 = scmp.lt.s32.totalorder %s319, 63
    %s321 = scalar_select %p320, %s319, 63
    %s322 = scalar_lea.vmem [#allocation5], %s321
    %v323 = vld [vmem:[%s322] sm:$0x1]
    %v324 = vadd.f32 %v315, %v323
    %s325 = sadd.s32 %s67, 28
    %s326 = sld [smem:[#allocation4 + %s325]]
    %p327 = scmp.gt.s32.totalorder %s326, 0
    %s328 = scalar_select %p327, %s326, 0
    %p329 = scmp.lt.s32.totalorder %s328, 63
    %s330 = scalar_select %p329, %s328, 63
    %s331 = scalar_lea.vmem [#allocation5], %s330
    %v332 = vld [vmem:[%s331] sm:$0x1]
    %v333 = vadd.f32 %v324, %v332
    %s334 = sadd.s32 %s67, 29
    %s335 = sld [smem:[#allocation4 + %s334]]
    %p336 = scmp.gt.s32.totalorder %s335, 0
    %s337 = scalar_select %p336, %s335, 0
    %p338 = scmp.lt.s32.totalorder %s337, 63
    %s339 = scalar_select %p338, %s337, 63
    %s340 = scalar_lea.vmem [#allocation5], %s339
    %v341 = vld [vmem:[%s340] sm:$0x1]
    %v342 = vadd.f32 %v333, %v341
    %s343 = sadd.s32 %s67, 30
    %s344 = sld [smem:[#allocation4 + %s343]]
    %p345 = scmp.gt.s32.totalorder %s344, 0
    %s346 = scalar_select %p345, %s344, 0
    %p347 = scmp.lt.s32.totalorder %s346, 63
    %s348 = scalar_select %p347, %s346, 63
    %s349 = scalar_lea.vmem [#allocation5], %s348
    %v350 = vld [vmem:[%s349] sm:$0x1]
    %v351 = vadd.f32 %v342, %v350
    %s352 = sadd.s32 %s67, 31
    %s353 = sld [smem:[#allocation4 + %s352]]
    %p354 = scmp.gt.s32.totalorder %s353, 0
    %s355 = scalar_select %p354, %s353, 0
    %p356 = scmp.lt.s32.totalorder %s355, 63
    %s357 = scalar_select %p356, %s355, 63
    %s358 = scalar_lea.vmem [#allocation5], %s357
    %v359 = vld [vmem:[%s358] sm:$0x1]
    %v360 = vadd.f32 %v351, %v359
    %v361 = vmul.f32 %v360, 0.125
    %362 = vst [vmem:[#allocation2 + $0x3] sm:$0x1] %v361
    %s363 = sadd.s32 %s67, 32
    %s364 = sld [smem:[#allocation4 + %s363]]
    %p365 = scmp.gt.s32.totalorder %s364, 0
    %s366 = scalar_select %p365, %s364, 0
    %p367 = scmp.lt.s32.totalorder %s366, 63
    %s368 = scalar_select %p367, %s366, 63
    %s369 = scalar_lea.vmem [#allocation5], %s368
    %v370 = vld [vmem:[%s369] sm:$0x1]
    %v371 = vadd.f32 %v370, 0.0
    %s372 = sadd.s32 %s67, 33
    %s373 = sld [smem:[#allocation4 + %s372]]
    %p374 = scmp.gt.s32.totalorder %s373, 0
    %s375 = scalar_select %p374, %s373, 0
    %p376 = scmp.lt.s32.totalorder %s375, 63
    %s377 = scalar_select %p376, %s375, 63
    %s378 = scalar_lea.vmem [#allocation5], %s377
    %v379 = vld [vmem:[%s378] sm:$0x1]
    %v380 = vadd.f32 %v371, %v379
    %s381 = sadd.s32 %s67, 34
    %s382 = sld [smem:[#allocation4 + %s381]]
    %p383 = scmp.gt.s32.totalorder %s382, 0
    %s384 = scalar_select %p383, %s382, 0
    %p385 = scmp.lt.s32.totalorder %s384, 63
    %s386 = scalar_select %p385, %s384, 63
    %s387 = scalar_lea.vmem [#allocation5], %s386
    %v388 = vld [vmem:[%s387] sm:$0x1]
    %v389 = vadd.f32 %v380, %v388
    %s390 = sadd.s32 %s67, 35
    %s391 = sld [smem:[#allocation4 + %s390]]
    %p392 = scmp.gt.s32.totalorder %s391, 0
    %s393 = scalar_select %p392, %s391, 0
    %p394 = scmp.lt.s32.totalorder %s393, 63
    %s395 = scalar_select %p394, %s393, 63
    %s396 = scalar_lea.vmem [#allocation5], %s395
    %v397 = vld [vmem:[%s396] sm:$0x1]
    %v398 = vadd.f32 %v389, %v397
    %s399 = sadd.s32 %s67, 36
    %s400 = sld [smem:[#allocation4 + %s399]]
    %p401 = scmp.gt.s32.totalorder %s400, 0
    %s402 = scalar_select %p401, %s400, 0
    %p403 = scmp.lt.s32.totalorder %s402, 63
    %s404 = scalar_select %p403, %s402, 63
    %s405 = scalar_lea.vmem [#allocation5], %s404
    %v406 = vld [vmem:[%s405] sm:$0x1]
    %v407 = vadd.f32 %v398, %v406
    %s408 = sadd.s32 %s67, 37
    %s409 = sld [smem:[#allocation4 + %s408]]
    %p410 = scmp.gt.s32.totalorder %s409, 0
    %s411 = scalar_select %p410, %s409, 0
    %p412 = scmp.lt.s32.totalorder %s411, 63
    %s413 = scalar_select %p412, %s411, 63
    %s414 = scalar_lea.vmem [#allocation5], %s413
    %v415 = vld [vmem:[%s414] sm:$0x1]
    %v416 = vadd.f32 %v407, %v415
    %s417 = sadd.s32 %s67, 38
    %s418 = sld [smem:[#allocation4 + %s417]]
    %p419 = scmp.gt.s32.totalorder %s418, 0
    %s420 = scalar_select %p419, %s418, 0
    %p421 = scmp.lt.s32.totalorder %s420, 63
    %s422 = scalar_select %p421, %s420, 63
    %s423 = scalar_lea.vmem [#allocation5], %s422
    %v424 = vld [vmem:[%s423] sm:$0x1]
    %v425 = vadd.f32 %v416, %v424
    %s426 = sadd.s32 %s67, 39
    %s427 = sld [smem:[#allocation4 + %s426]]
    %p428 = scmp.gt.s32.totalorder %s427, 0
    %s429 = scalar_select %p428, %s427, 0
    %p430 = scmp.lt.s32.totalorder %s429, 63
    %s431 = scalar_select %p430, %s429, 63
    %s432 = scalar_lea.vmem [#allocation5], %s431
    %v433 = vld [vmem:[%s432] sm:$0x1]
    %v434 = vadd.f32 %v425, %v433
    %v435 = vmul.f32 %v434, 0.125
    %436 = vst [vmem:[#allocation2 + $0x4] sm:$0x1] %v435
    %s437 = sadd.s32 %s67, 40
    %s438 = sld [smem:[#allocation4 + %s437]]
    %p439 = scmp.gt.s32.totalorder %s438, 0
    %s440 = scalar_select %p439, %s438, 0
    %p441 = scmp.lt.s32.totalorder %s440, 63
    %s442 = scalar_select %p441, %s440, 63
    %s443 = scalar_lea.vmem [#allocation5], %s442
    %v444 = vld [vmem:[%s443] sm:$0x1]
    %v445 = vadd.f32 %v444, 0.0
    %s446 = sadd.s32 %s67, 41
    %s447 = sld [smem:[#allocation4 + %s446]]
    %p448 = scmp.gt.s32.totalorder %s447, 0
    %s449 = scalar_select %p448, %s447, 0
    %p450 = scmp.lt.s32.totalorder %s449, 63
    %s451 = scalar_select %p450, %s449, 63
    %s452 = scalar_lea.vmem [#allocation5], %s451
    %v453 = vld [vmem:[%s452] sm:$0x1]
    %v454 = vadd.f32 %v445, %v453
    %s455 = sadd.s32 %s67, 42
    %s456 = sld [smem:[#allocation4 + %s455]]
    %p457 = scmp.gt.s32.totalorder %s456, 0
    %s458 = scalar_select %p457, %s456, 0
    %p459 = scmp.lt.s32.totalorder %s458, 63
    %s460 = scalar_select %p459, %s458, 63
    %s461 = scalar_lea.vmem [#allocation5], %s460
    %v462 = vld [vmem:[%s461] sm:$0x1]
    %v463 = vadd.f32 %v454, %v462
    %s464 = sadd.s32 %s67, 43
    %s465 = sld [smem:[#allocation4 + %s464]]
    %p466 = scmp.gt.s32.totalorder %s465, 0
    %s467 = scalar_select %p466, %s465, 0
    %p468 = scmp.lt.s32.totalorder %s467, 63
    %s469 = scalar_select %p468, %s467, 63
    %s470 = scalar_lea.vmem [#allocation5], %s469
    %v471 = vld [vmem:[%s470] sm:$0x1]
    %v472 = vadd.f32 %v463, %v471
    %s473 = sadd.s32 %s67, 44
    %s474 = sld [smem:[#allocation4 + %s473]]
    %p475 = scmp.gt.s32.totalorder %s474, 0
    %s476 = scalar_select %p475, %s474, 0
    %p477 = scmp.lt.s32.totalorder %s476, 63
    %s478 = scalar_select %p477, %s476, 63
    %s479 = scalar_lea.vmem [#allocation5], %s478
    %v480 = vld [vmem:[%s479] sm:$0x1]
    %v481 = vadd.f32 %v472, %v480
    %s482 = sadd.s32 %s67, 45
    %s483 = sld [smem:[#allocation4 + %s482]]
    %p484 = scmp.gt.s32.totalorder %s483, 0
    %s485 = scalar_select %p484, %s483, 0
    %p486 = scmp.lt.s32.totalorder %s485, 63
    %s487 = scalar_select %p486, %s485, 63
    %s488 = scalar_lea.vmem [#allocation5], %s487
    %v489 = vld [vmem:[%s488] sm:$0x1]
    %v490 = vadd.f32 %v481, %v489
    %s491 = sadd.s32 %s67, 46
    %s492 = sld [smem:[#allocation4 + %s491]]
    %p493 = scmp.gt.s32.totalorder %s492, 0
    %s494 = scalar_select %p493, %s492, 0
    %p495 = scmp.lt.s32.totalorder %s494, 63
    %s496 = scalar_select %p495, %s494, 63
    %s497 = scalar_lea.vmem [#allocation5], %s496
    %v498 = vld [vmem:[%s497] sm:$0x1]
    %v499 = vadd.f32 %v490, %v498
    %s500 = sadd.s32 %s67, 47
    %s501 = sld [smem:[#allocation4 + %s500]]
    %p502 = scmp.gt.s32.totalorder %s501, 0
    %s503 = scalar_select %p502, %s501, 0
    %p504 = scmp.lt.s32.totalorder %s503, 63
    %s505 = scalar_select %p504, %s503, 63
    %s506 = scalar_lea.vmem [#allocation5], %s505
    %v507 = vld [vmem:[%s506] sm:$0x1]
    %v508 = vadd.f32 %v499, %v507
    %v509 = vmul.f32 %v508, 0.125
    %510 = vst [vmem:[#allocation2 + $0x5] sm:$0x1] %v509
    %s511 = sadd.s32 %s67, 48
    %s512 = sld [smem:[#allocation4 + %s511]]
    %p513 = scmp.gt.s32.totalorder %s512, 0
    %s514 = scalar_select %p513, %s512, 0
    %p515 = scmp.lt.s32.totalorder %s514, 63
    %s516 = scalar_select %p515, %s514, 63
    %s517 = scalar_lea.vmem [#allocation5], %s516
    %v518 = vld [vmem:[%s517] sm:$0x1]
    %v519 = vadd.f32 %v518, 0.0
    %s520 = sadd.s32 %s67, 49
    %s521 = sld [smem:[#allocation4 + %s520]]
    %p522 = scmp.gt.s32.totalorder %s521, 0
    %s523 = scalar_select %p522, %s521, 0
    %p524 = scmp.lt.s32.totalorder %s523, 63
    %s525 = scalar_select %p524, %s523, 63
    %s526 = scalar_lea.vmem [#allocation5], %s525
    %v527 = vld [vmem:[%s526] sm:$0x1]
    %v528 = vadd.f32 %v519, %v527
    %s529 = sadd.s32 %s67, 50
    %s530 = sld [smem:[#allocation4 + %s529]]
    %p531 = scmp.gt.s32.totalorder %s530, 0
    %s532 = scalar_select %p531, %s530, 0
    %p533 = scmp.lt.s32.totalorder %s532, 63
    %s534 = scalar_select %p533, %s532, 63
    %s535 = scalar_lea.vmem [#allocation5], %s534
    %v536 = vld [vmem:[%s535] sm:$0x1]
    %v537 = vadd.f32 %v528, %v536
    %s538 = sadd.s32 %s67, 51
    %s539 = sld [smem:[#allocation4 + %s538]]
    %p540 = scmp.gt.s32.totalorder %s539, 0
    %s541 = scalar_select %p540, %s539, 0
    %p542 = scmp.lt.s32.totalorder %s541, 63
    %s543 = scalar_select %p542, %s541, 63
    %s544 = scalar_lea.vmem [#allocation5], %s543
    %v545 = vld [vmem:[%s544] sm:$0x1]
    %v546 = vadd.f32 %v537, %v545
    %s547 = sadd.s32 %s67, 52
    %s548 = sld [smem:[#allocation4 + %s547]]
    %p549 = scmp.gt.s32.totalorder %s548, 0
    %s550 = scalar_select %p549, %s548, 0
    %p551 = scmp.lt.s32.totalorder %s550, 63
    %s552 = scalar_select %p551, %s550, 63
    %s553 = scalar_lea.vmem [#allocation5], %s552
    %v554 = vld [vmem:[%s553] sm:$0x1]
    %v555 = vadd.f32 %v546, %v554
    %s556 = sadd.s32 %s67, 53
    %s557 = sld [smem:[#allocation4 + %s556]]
    %p558 = scmp.gt.s32.totalorder %s557, 0
    %s559 = scalar_select %p558, %s557, 0
    %p560 = scmp.lt.s32.totalorder %s559, 63
    %s561 = scalar_select %p560, %s559, 63
    %s562 = scalar_lea.vmem [#allocation5], %s561
    %v563 = vld [vmem:[%s562] sm:$0x1]
    %v564 = vadd.f32 %v555, %v563
    %s565 = sadd.s32 %s67, 54
    %s566 = sld [smem:[#allocation4 + %s565]]
    %p567 = scmp.gt.s32.totalorder %s566, 0
    %s568 = scalar_select %p567, %s566, 0
    %p569 = scmp.lt.s32.totalorder %s568, 63
    %s570 = scalar_select %p569, %s568, 63
    %s571 = scalar_lea.vmem [#allocation5], %s570
    %v572 = vld [vmem:[%s571] sm:$0x1]
    %v573 = vadd.f32 %v564, %v572
    %s574 = sadd.s32 %s67, 55
    %s575 = sld [smem:[#allocation4 + %s574]]
    %p576 = scmp.gt.s32.totalorder %s575, 0
    %s577 = scalar_select %p576, %s575, 0
    %p578 = scmp.lt.s32.totalorder %s577, 63
    %s579 = scalar_select %p578, %s577, 63
    %s580 = scalar_lea.vmem [#allocation5], %s579
    %v581 = vld [vmem:[%s580] sm:$0x1]
    %v582 = vadd.f32 %v573, %v581
    %v583 = vmul.f32 %v582, 0.125
    %584 = vst [vmem:[#allocation2 + $0x6] sm:$0x1] %v583
    %s585 = sadd.s32 %s67, 56
    %s586 = sld [smem:[#allocation4 + %s585]]
    %p587 = scmp.gt.s32.totalorder %s586, 0
    %s588 = scalar_select %p587, %s586, 0
    %p589 = scmp.lt.s32.totalorder %s588, 63
    %s590 = scalar_select %p589, %s588, 63
    %s591 = scalar_lea.vmem [#allocation5], %s590
    %v592 = vld [vmem:[%s591] sm:$0x1]
    %v593 = vadd.f32 %v592, 0.0
    %s594 = sadd.s32 %s67, 57
    %s595 = sld [smem:[#allocation4 + %s594]]
    %p596 = scmp.gt.s32.totalorder %s595, 0
    %s597 = scalar_select %p596, %s595, 0
    %p598 = scmp.lt.s32.totalorder %s597, 63
    %s599 = scalar_select %p598, %s597, 63
    %s600 = scalar_lea.vmem [#allocation5], %s599
    %v601 = vld [vmem:[%s600] sm:$0x1]
    %v602 = vadd.f32 %v593, %v601
    %s603 = sadd.s32 %s67, 58
    %s604 = sld [smem:[#allocation4 + %s603]]
    %p605 = scmp.gt.s32.totalorder %s604, 0
    %s606 = scalar_select %p605, %s604, 0
    %p607 = scmp.lt.s32.totalorder %s606, 63
    %s608 = scalar_select %p607, %s606, 63
    %s609 = scalar_lea.vmem [#allocation5], %s608
    %v610 = vld [vmem:[%s609] sm:$0x1]
    %v611 = vadd.f32 %v602, %v610
    %s612 = sadd.s32 %s67, 59
    %s613 = sld [smem:[#allocation4 + %s612]]
    %p614 = scmp.gt.s32.totalorder %s613, 0
    %s615 = scalar_select %p614, %s613, 0
    %p616 = scmp.lt.s32.totalorder %s615, 63
    %s617 = scalar_select %p616, %s615, 63
    %s618 = scalar_lea.vmem [#allocation5], %s617
    %v619 = vld [vmem:[%s618] sm:$0x1]
    %v620 = vadd.f32 %v611, %v619
    %s621 = sadd.s32 %s67, 60
    %s622 = sld [smem:[#allocation4 + %s621]]
    %p623 = scmp.gt.s32.totalorder %s622, 0
    %s624 = scalar_select %p623, %s622, 0
    %p625 = scmp.lt.s32.totalorder %s624, 63
    %s626 = scalar_select %p625, %s624, 63
    %s627 = scalar_lea.vmem [#allocation5], %s626
    %v628 = vld [vmem:[%s627] sm:$0x1]
    %v629 = vadd.f32 %v620, %v628
    %s630 = sadd.s32 %s67, 61
    %s631 = sld [smem:[#allocation4 + %s630]]
    %p632 = scmp.gt.s32.totalorder %s631, 0
    %s633 = scalar_select %p632, %s631, 0
    %p634 = scmp.lt.s32.totalorder %s633, 63
    %s635 = scalar_select %p634, %s633, 63
    %s636 = scalar_lea.vmem [#allocation5], %s635
    %v637 = vld [vmem:[%s636] sm:$0x1]
    %v638 = vadd.f32 %v629, %v637
    %s639 = sadd.s32 %s67, 62
    %s640 = sld [smem:[#allocation4 + %s639]]
    %p641 = scmp.gt.s32.totalorder %s640, 0
    %s642 = scalar_select %p641, %s640, 0
    %p643 = scmp.lt.s32.totalorder %s642, 63
    %s644 = scalar_select %p643, %s642, 63
    %s645 = scalar_lea.vmem [#allocation5], %s644
    %v646 = vld [vmem:[%s645] sm:$0x1]
    %v647 = vadd.f32 %v638, %v646
    %s648 = sadd.s32 %s67, 63
    %s649 = sld [smem:[#allocation4 + %s648]]
    %p650 = scmp.gt.s32.totalorder %s649, 0
    %s651 = scalar_select %p650, %s649, 0
    %p652 = scmp.lt.s32.totalorder %s651, 63
    %s653 = scalar_select %p652, %s651, 63
    %s654 = scalar_lea.vmem [#allocation5], %s653
    %v655 = vld [vmem:[%s654] sm:$0x1]
    %v656 = vadd.f32 %v647, %v655
    %v657 = vmul.f32 %v656, 0.125
    %658 = vst [vmem:[#allocation2 + $0x7] sm:$0x1] %v657
    %v659 = vld [vmem:[#allocation2] sm:$0xff]
    %v660 = vld [vmem:[#allocation8] sm:$0xff]
    %v661 = vld [vmem:[#allocation8 + $0x8] sm:$0xff]
    %v662 = vld [vmem:[#allocation8 + $0x10] sm:$0xff]
    %v663 = vld [vmem:[#allocation8 + $0x18] sm:$0xff]
    %v664 = vld [vmem:[#allocation8 + $0x20] sm:$0xff]
    %v665 = vld [vmem:[#allocation8 + $0x28] sm:$0xff]
    %v666 = vld [vmem:[#allocation8 + $0x30] sm:$0xff]
    %v667 = vld [vmem:[#allocation8 + $0x38] sm:$0xff]
    %v668 = vld [vmem:[#allocation8 + $0x40] sm:$0xff]
    %v669 = vld [vmem:[#allocation8 + $0x48] sm:$0xff]
    %v670 = vld [vmem:[#allocation8 + $0x50] sm:$0xff]
    %v671 = vld [vmem:[#allocation8 + $0x58] sm:$0xff]
    %v672 = vld [vmem:[#allocation8 + $0x60] sm:$0xff]
    %v673 = vld [vmem:[#allocation8 + $0x68] sm:$0xff]
    %v674 = vld [vmem:[#allocation8 + $0x70] sm:$0xff]
    %v675 = vld [vmem:[#allocation8 + $0x78] sm:$0xff]
    %v676 = vld [vmem:[%s3] sm:$0x1]
    %v678 = vlaneseq
    %v679 = vshrl.u32 %v678, 7
    %v680 = vsub.s32 0, %v679
    %v681 = vrot.slane %v676, %v680
    %683 = vmatprep.subr.mxu0 0.0
    %684 = vmatpush1.msra.mxu0 %v675
    %685 = vmatprep.subr.mxu0 0.0
    %686 = vmatpush1.msra.mxu0 %v674
    %687 = vmatprep.subr.mxu0 0.0
    %688 = vmatpush1.msra.mxu0 %v673
    %689 = vmatprep.subr.mxu0 0.0
    %690 = vmatpush1.msra.mxu0 %v672
    %691 = vmatprep.subr.mxu0 0.0
    %692 = vmatpush1.msra.mxu0 %v671
    %693 = vmatprep.subr.mxu0 0.0
    %694 = vmatpush1.msra.mxu0 %v670
    %695 = vmatprep.subr.mxu0 0.0
    %696 = vmatpush1.msra.mxu0 %v669
    %697 = vmatprep.subr.mxu0 0.0
    %698 = vmatpush1.msra.mxu0 %v668
    %699 = vmatprep.subr.mxu0 0.0
    %700 = vmatpush1.msra.mxu0 %v667
    %701 = vmatprep.subr.mxu0 0.0
    %702 = vmatpush1.msra.mxu0 %v666
    %703 = vmatprep.subr.mxu0 0.0
    %704 = vmatpush1.msra.mxu0 %v665
    %705 = vmatprep.subr.mxu0 0.0
    %706 = vmatpush1.msra.mxu0 %v664
    %707 = vmatprep.subr.mxu0 0.0
    %708 = vmatpush1.msra.mxu0 %v663
    %709 = vmatprep.subr.mxu0 0.0
    %710 = vmatpush1.msra.mxu0 %v662
    %711 = vmatprep.subr.mxu0 0.0
    %712 = vmatpush1.msra.mxu0 %v661
    %713 = vmatprep.subr.mxu0 0.0
    %714 = vmatpush1.msra.mxu0 %v660
    %715 = vmatprep.subr.mxu0 0.0
    %716 = vmatpush2.msra.mxu0 0.0
    %717 = vmatprep.subr.mxu0 0.0
    %718 = vmatpush2.msra.mxu0 0.0
    %719 = vmatprep.subr.mxu0 0.0
    %720 = vmatpush2.msra.mxu0 0.0
    %721 = vmatprep.subr.mxu0 0.0
    %722 = vmatpush2.msra.mxu0 0.0
    %723 = vmatprep.subr.mxu0 0.0
    %724 = vmatpush2.msra.mxu0 0.0
    %725 = vmatprep.subr.mxu0 0.0
    %726 = vmatpush2.msra.mxu0 0.0
    %727 = vmatprep.subr.mxu0 0.0
    %728 = vmatpush2.msra.mxu0 0.0
    %729 = vmatprep.subr.mxu0 0.0
    %730 = vmatpush2.msra.mxu0 0.0
    %731 = vmatprep.subr.mxu0 0.0
    %732 = vmatpush2.msra.mxu0 0.0
    %733 = vmatprep.subr.mxu0 0.0
    %734 = vmatpush2.msra.mxu0 0.0
    %735 = vmatprep.subr.mxu0 0.0
    %736 = vmatpush2.msra.mxu0 0.0
    %737 = vmatprep.subr.mxu0 0.0
    %738 = vmatpush2.msra.mxu0 0.0
    %739 = vmatprep.subr.mxu0 0.0
    %740 = vmatpush2.msra.mxu0 0.0
    %741 = vmatprep.subr.mxu0 0.0
    %742 = vmatpush2.msra.mxu0 0.0
    %743 = vmatprep.subr.mxu0 0.0
    %744 = vmatpush2.msra.mxu0 0.0
    %745 = vmatprep.subr.mxu0 0.0
    %746 = vmatpush2.msra.mxu0 0.0
    %747 = vmatprep.mubr.f32.mxu0 0.0
    %748 = vmatmul.mubr.f32.gmra.mxu0 %v659
    %v749 = vpop.f32.mrf.mxu0
    %v750 = vadd.f32 %v681, %v749
    %v751 = vpop.f32.mrf.mxu0
    %752 = vdwg.mxu0
    %v753 = vtanh.pop %v750
    %v754 = vld [vmem:[#allocation10] sm:$0xff]
    %v755 = vld [vmem:[#allocation10 + $0x8] sm:$0xff]
    %v756 = vld [vmem:[#allocation10 + $0x10] sm:$0xff]
    %v757 = vld [vmem:[#allocation10 + $0x18] sm:$0xff]
    %v758 = vld [vmem:[#allocation10 + $0x20] sm:$0xff]
    %v759 = vld [vmem:[#allocation10 + $0x28] sm:$0xff]
    %v760 = vld [vmem:[#allocation10 + $0x30] sm:$0xff]
    %v761 = vld [vmem:[#allocation10 + $0x38] sm:$0xff]
    %v762 = vld [vmem:[#allocation10 + $0x40] sm:$0xff]
    %v763 = vld [vmem:[#allocation10 + $0x48] sm:$0xff]
    %v764 = vld [vmem:[#allocation10 + $0x50] sm:$0xff]
    %v765 = vld [vmem:[#allocation10 + $0x58] sm:$0xff]
    %v766 = vld [vmem:[#allocation10 + $0x60] sm:$0xff]
    %v767 = vld [vmem:[#allocation10 + $0x68] sm:$0xff]
    %v768 = vld [vmem:[#allocation10 + $0x70] sm:$0xff]
    %v769 = vld [vmem:[#allocation10 + $0x78] sm:$0xff]
    %v770 = vld [vmem:[%s5] sm:$0x1]
    %v772 = vlaneseq
    %v773 = vshrl.u32 %v772, 7
    %v774 = vsub.s32 0, %v773
    %v775 = vrot.slane %v770, %v774
    %777 = vmatprep.subr.mxu0 0.0
    %778 = vmatpush1.msra.mxu0 %v769
    %779 = vmatprep.subr.mxu0 0.0
    %780 = vmatpush1.msra.mxu0 %v768
    %781 = vmatprep.subr.mxu0 0.0
    %782 = vmatpush1.msra.mxu0 %v767
    %783 = vmatprep.subr.mxu0 0.0
    %784 = vmatpush1.msra.mxu0 %v766
    %785 = vmatprep.subr.mxu0 0.0
    %786 = vmatpush1.msra.mxu0 %v765
    %787 = vmatprep.subr.mxu0 0.0
    %788 = vmatpush1.msra.mxu0 %v764
    %789 = vmatprep.subr.mxu0 0.0
    %790 = vmatpush1.msra.mxu0 %v763
    %791 = vmatprep.subr.mxu0 0.0
    %792 = vmatpush1.msra.mxu0 %v762
    %793 = vmatprep.subr.mxu0 0.0
    %794 = vmatpush1.msra.mxu0 %v761
    %795 = vmatprep.subr.mxu0 0.0
    %796 = vmatpush1.msra.mxu0 %v760
    %797 = vmatprep.subr.mxu0 0.0
    %798 = vmatpush1.msra.mxu0 %v759
    %799 = vmatprep.subr.mxu0 0.0
    %800 = vmatpush1.msra.mxu0 %v758
    %801 = vmatprep.subr.mxu0 0.0
    %802 = vmatpush1.msra.mxu0 %v757
    %803 = vmatprep.subr.mxu0 0.0
    %804 = vmatpush1.msra.mxu0 %v756
    %805 = vmatprep.subr.mxu0 0.0
    %806 = vmatpush1.msra.mxu0 %v755
    %807 = vmatprep.subr.mxu0 0.0
    %808 = vmatpush1.msra.mxu0 %v754
    %809 = vmatprep.subr.mxu0 0.0
    %810 = vmatpush2.msra.mxu0 0.0
    %811 = vmatprep.subr.mxu0 0.0
    %812 = vmatpush2.msra.mxu0 0.0
    %813 = vmatprep.subr.mxu0 0.0
    %814 = vmatpush2.msra.mxu0 0.0
    %815 = vmatprep.subr.mxu0 0.0
    %816 = vmatpush2.msra.mxu0 0.0
    %817 = vmatprep.subr.mxu0 0.0
    %818 = vmatpush2.msra.mxu0 0.0
    %819 = vmatprep.subr.mxu0 0.0
    %820 = vmatpush2.msra.mxu0 0.0
    %821 = vmatprep.subr.mxu0 0.0
    %822 = vmatpush2.msra.mxu0 0.0
    %823 = vmatprep.subr.mxu0 0.0
    %824 = vmatpush2.msra.mxu0 0.0
    %825 = vmatprep.subr.mxu0 0.0
    %826 = vmatpush2.msra.mxu0 0.0
    %827 = vmatprep.subr.mxu0 0.0
    %828 = vmatpush2.msra.mxu0 0.0
    %829 = vmatprep.subr.mxu0 0.0
    %830 = vmatpush2.msra.mxu0 0.0
    %831 = vmatprep.subr.mxu0 0.0
    %832 = vmatpush2.msra.mxu0 0.0
    %833 = vmatprep.subr.mxu0 0.0
    %834 = vmatpush2.msra.mxu0 0.0
    %835 = vmatprep.subr.mxu0 0.0
    %836 = vmatpush2.msra.mxu0 0.0
    %837 = vmatprep.subr.mxu0 0.0
    %838 = vmatpush2.msra.mxu0 0.0
    %839 = vmatprep.subr.mxu0 0.0
    %840 = vmatpush2.msra.mxu0 0.0
    %841 = vmatprep.mubr.f32.mxu0 0.0
    %842 = vmatmul.mubr.f32.gmra.mxu0 %v753
    %v843 = vpop.f32.mrf.mxu0
    %v844 = vadd.f32 %v775, %v843
    %v845 = vpop.f32.mrf.mxu0
    %846 = vdwg.mxu0
    %847 = vmax.xlane.f32.xlu0 %v844
    %v848 = vpop.xlane.xlu0 %847
    %v849 = vsub.f32 %v844, %v848
    %v850 = vmul.f32 %v849, 1.442695
    %v851 = vpow.pop %v850
    %852 = vadd.xlane.f32.xlu0 %v851
    %v853 = vpop.xlane.xlu0 %852
    %v854 = vrcp.pop %v853
    %v855 = vmul.f32 %v851, %v854
    %856 = vst [vmem:[#allocation11] sm:$0xff] %v855
    // Predicated region
    $region34: #{tpu_custom_call.1} parent=1 // pred_check
      _
    $region35: #{tpu_custom_call.1} parent=1 // pred_check_branch
      %858 = sbr.rel (0) target = $region37
    $region36: #{tpu_custom_call.1} parent=1 // pred_region
      %s860 = ssub.s32 128, 128
      %861 = vsyncadd [#allocation7], %s860
      %s863 = sshll.u32 [#allocation11], 4
      %s864 = int_to_ptr.vmem [resolvable:$true] %s863
      %866 = dma.vmem_to_hbm [thread:$0]  %s864, 128, %s6, [#allocation7]
    $region37: #{tpu_custom_call.1} parent=1 // pred_fallthru
      _
    // Predicated region
    $region38: #{tpu_custom_call.1} parent=1 // pred_check
      _
    $region39: #{tpu_custom_call.1} parent=1 // pred_check_branch
      %868 = sbr.rel (0) target = $region41
    $region40: #{tpu_custom_call.1} parent=1 // pred_region
      %869 = dma.done [#allocation7], 128
    $region41: #{tpu_custom_call.1} parent=1 // pred_fallthru
      _
    %870 = vsyncpa [#allocation6], 1
    %871 = vsyncpa [#allocation9], 1
    %872 = vsyncpa [#allocation7], 1

</llo_original>
